<compile_context>
chip_gen: v7x
topology: tpu7x:2x2x1
jax: 0.10.0
libtpu: 0.0.40
codegen_flags: <defaults>
</compile_context>

<pallas_src>
import jax
import jax.numpy as jnp
from jax.experimental import pallas as pl
from jax.experimental.pallas import tpu as pltpu


def _round_up(x, m):
    return (x + m - 1) // m * m


def _bn_relu_deconv_kernel(y_ref, scale_ref, shift_ref, dw_ref, db_ref, out_ref):
    """Phase 2: BN (folded scale/shift, f32) + ReLU + deconv-as-matmul (bf16)."""
    y = y_ref[0].astype(jnp.float32) * scale_ref[...] + shift_ref[...]
    y = jnp.maximum(y, 0.0).astype(jnp.bfloat16)          # cast right before MXU
    out = jnp.dot(y, dw_ref[...], preferred_element_type=jnp.float32) + db_ref[...]
    out_ref[0] = out.astype(jnp.bfloat16)                 # bf16 store (item 10)


def decoder_block_forward(x_nchw, cw, cb, gamma, beta, dw, db, eps=1e-5):
    """x_nchw: (N, Cin, H, W); cw: (Cmid, Cin, 3, 3); dw: (Cmid, Cout, 2, 2)."""
    del cb  # Conv bias is exactly cancelled by training-mode BatchNorm.
    N, Cin, H, W = x_nchw.shape
    KH = KW = 3
    Ho, Wo = H - KH + 1, W - KW + 1
    Cmid = cw.shape[0]
    Cout = dw.shape[1]

    n_valid = Ho * Wo                  # valid conv positions per image
    M = N * n_valid                    # total valid conv positions (BN count)
    CP = _round_up(Cmid, 128)          # lane-dense middle channels
    DP = _round_up(4 * Cout, 128)      # lane-dense deconv output columns
    Mi = _round_up(Ho * W, 16)         # full-width conv rows per image (bf16 tile)
    HWp = _round_up(Mi + (KH - 1) * W + (KW - 1), 16)   # padded flat x rows/image

    # ---- glue (cheap, single pass over small x): NHWC flat strip + weights ----
    x = jnp.transpose(x_nchw, (0, 2, 3, 1)).reshape(N, H * W, Cin)
    x = jnp.pad(x, ((0, 0), (0, HWp - H * W), (0, 0))).astype(jnp.bfloat16)

    cw_shifts = jnp.transpose(cw, (2, 3, 1, 0)).reshape(KH * KW, Cin, Cmid)
    cw_shifts = jnp.pad(cw_shifts, ((0, 0), (0, 0), (0, CP - Cmid))).astype(jnp.bfloat16)

    # Valid-row mask over the full-width row grid (w < Wo and within Ho*W).
    row = jnp.arange(Mi, dtype=jnp.int32)
    valid = ((row % W) < Wo) & (row < Ho * W)
    mask = valid.astype(jnp.float32)[:, None]              # (Mi, 1)

    dw_mat = jnp.transpose(dw, (0, 2, 3, 1)).reshape(Cmid, 4 * Cout)
    dw_mat = jnp.pad(dw_mat, ((0, CP - Cmid), (0, DP - 4 * Cout))).astype(jnp.bfloat16)
    db_row = jnp.pad(jnp.tile(db, 4), (0, DP - 4 * Cout))[None, :].astype(jnp.float32)

    cparams = pltpu.CompilerParams(
        dimension_semantics=("parallel",),                 # megacore-shardable
        vmem_limit_bytes=64 * 1024 * 1024)                 # explicit (v5e default 16 MiB)

    # ---- phase 1: in-kernel im2col conv + per-image BN partial stats ----
    def _conv_stats_kernel(x_ref, w_ref, mask_ref, y_ref, stats_ref):
        # x_ref: (1, HWp, Cin) bf16, w_ref: (9, Cin, CP) bf16, mask_ref: (Mi, 1) f32
        x_img = x_ref[0]                                   # (HWp, Cin)
        acc = jnp.zeros((Mi, CP), jnp.float32)
        for kh in range(KH):
            for kw in range(KW):
                s = kh * W + kw                            # static row shift
                acc += jnp.dot(x_img[s:s + Mi], w_ref[kh * KW + kw],
                               preferred_element_type=jnp.float32)
        y_ref[0] = acc.astype(jnp.bfloat16)                # bf16 y intermediate

        m = mask_ref[...]                                  # (Mi, 1)
        ym = acc * m
        ssum = jnp.sum(ym, axis=0, keepdims=True)          # (1, CP) masked sum
        mu = ssum * (1.0 / n_valid)                        # per-image mean
        cen = (acc - mu) * m
        ssq = jnp.sum(cen * cen, axis=0, keepdims=True)    # centered 2nd moment
        stats_ref[0] = jnp.concatenate([ssum, ssq], axis=0)

    y_img, stats = pl.pallas_call(
        _conv_stats_kernel,
        out_shape=(jax.ShapeDtypeStruct((N, Mi, CP), jnp.bfloat16),
                   jax.ShapeDtypeStruct((N, 2, CP), jnp.float32)),
        grid=(N,),
        in_specs=[pl.BlockSpec((1, HWp, Cin), lambda n: (n, 0, 0)),
                  pl.BlockSpec((KH * KW, Cin, CP), lambda n: (0, 0, 0)),
                  pl.BlockSpec((Mi, 1), lambda n: (0, 0))],
        out_specs=(pl.BlockSpec((1, Mi, CP), lambda n: (n, 0, 0)),
                   pl.BlockSpec((1, 2, CP), lambda n: (n, 0, 0))),
        compiler_params=cparams,
    )(x, cw_shifts, mask)

    # ---- tiny glue: Chan-combine per-image stats -> folded scale/shift ----
    sums = stats[:, 0, :]                                  # (N, CP)
    m2s = stats[:, 1, :]                                   # (N, CP) centered
    mean_n = sums / n_valid
    mean = jnp.sum(sums, axis=0) / M
    var = (jnp.sum(m2s, axis=0)
           + n_valid * jnp.sum((mean_n - mean[None, :]) ** 2, axis=0)) / M
    gamma_p = jnp.pad(gamma, (0, CP - Cmid)).astype(jnp.float32)
    beta_p = jnp.pad(beta, (0, CP - Cmid)).astype(jnp.float32)
    scale_vec = gamma_p * jax.lax.rsqrt(var + eps)
    shift_vec = beta_p - mean * scale_vec
    scale = scale_vec[None, :]
    shift = shift_vec[None, :]

    # ---- phase 2: BN + ReLU + stride-2/k-2 deconv as one lane-dense matmul ----
    out_img = pl.pallas_call(
        _bn_relu_deconv_kernel,
        out_shape=jax.ShapeDtypeStruct((N, Mi, DP), jnp.bfloat16),
        grid=(N,),
        in_specs=[pl.BlockSpec((1, Mi, CP), lambda n: (n, 0, 0)),
                  pl.BlockSpec((1, CP), lambda n: (0, 0)),
                  pl.BlockSpec((1, CP), lambda n: (0, 0)),
                  pl.BlockSpec((CP, DP), lambda n: (0, 0)),
                  pl.BlockSpec((1, DP), lambda n: (0, 0))],
        out_specs=pl.BlockSpec((1, Mi, DP), lambda n: (n, 0, 0)),
        compiler_params=cparams,
    )(y_img, scale, shift, dw_mat, db_row)

    # ---- glue: drop invalid columns/padding, one transpose pass, cast to f32 ----
    out = out_img[:, :Ho * W, :4 * Cout].reshape(N, Ho, W, 2, 2, Cout)
    out = out[:, :, :Wo]                                   # drop full-width garbage
    out = out.transpose(0, 5, 1, 3, 2, 4).reshape(N, Cout, 2 * Ho, 2 * Wo)
    return out.astype(jnp.float32)


def reference_forward(x, cw, cb, gamma, beta, dw, db, eps=1e-5):
    """Pure-JAX f32 reference of the same forward pass (NCHW)."""
    y = jax.lax.conv_general_dilated(
        x, cw, (1, 1), 'VALID', dimension_numbers=('NCHW', 'OIHW', 'NCHW'))
    y = y + cb[None, :, None, None]
    mean = y.mean(axis=(0, 2, 3), keepdims=True)
    var = ((y - mean) ** 2).mean(axis=(0, 2, 3), keepdims=True)
    y = (y - mean) / jnp.sqrt(var + eps)
    y = y * gamma[None, :, None, None] + beta[None, :, None, None]
    y = jnp.maximum(y, 0.0)
    N, Cm, Ho, Wo = y.shape
    Cout = dw.shape[1]
    out = jnp.zeros((N, Cout, 2 * Ho, 2 * Wo), jnp.float32)
    for kh in range(2):
        for kw in range(2):
            contrib = jnp.einsum('nchw,cd->ndhw', y, dw[:, :, kh, kw])
            out = out.at[:, :, kh::2, kw::2].add(contrib)
    return out + db[None, :, None, None]


if __name__ == "__main__":
    key = jax.random.PRNGKey(0)
    k = jax.random.split(key, 7)

    # small shapes consistent with _DecoderBlock(in=4, middle=8, out=4)
    N, Cin, H, W = 2, 4, 16, 16
    Cmid, Cout = 8, 4

    x = jax.random.normal(k[0], (N, Cin, H, W), jnp.float32)
    conv_w = 0.1 * jax.random.normal(k[1], (Cmid, Cin, 3, 3), jnp.float32)
    conv_b = 0.1 * jax.random.normal(k[2], (Cmid,), jnp.float32)
    bn_gamma = 1.0 + 0.1 * jax.random.normal(k[3], (Cmid,), jnp.float32)
    bn_beta = 0.1 * jax.random.normal(k[4], (Cmid,), jnp.float32)
    deconv_w = 0.1 * jax.random.normal(k[5], (Cmid, Cout, 2, 2), jnp.float32)
    deconv_b = 0.1 * jax.random.normal(k[6], (Cout,), jnp.float32)

    out = decoder_block_forward(x, conv_w, conv_b, bn_gamma, bn_beta,
                                deconv_w, deconv_b)
    out = jax.block_until_ready(out)

    ref = reference_forward(x, conv_w, conv_b, bn_gamma, bn_beta,
                            deconv_w, deconv_b)

    assert out.shape == (N, Cout, 2 * (H - 2), 2 * (W - 2)), out.shape
    # bf16 MXU operands + bf16 y/out intermediates (f32 accumulation/BN math).
    assert jnp.allclose(out, ref, rtol=2e-2, atol=2e-2), float(
        jnp.max(jnp.abs(out - ref)))

    print("KERNEL_OK")
</pallas_src>

<mosaic_0001>
module attributes {stable_mosaic.version = 11 : i64} {
  func.func @_conv_stats_kernel(%arg0: i32, %arg1: memref<1x272x4xbf16, #tpu.memory_space<vmem>>, %arg2: memref<9x4x128xbf16, #tpu.memory_space<vmem>>, %arg3: memref<224x1xf32, #tpu.memory_space<vmem>>, %arg4: memref<1x224x128xbf16, #tpu.memory_space<vmem>>, %arg5: memref<1x2x128xf32, #tpu.memory_space<vmem>>) attributes {dimension_semantics = [#tpu.dimension_semantics<parallel>], iteration_bounds = array<i64: 2>, scalar_prefetch = 0 : i64, scratch_operands = 0 : i64, tpu.core_type = #tpu.core_type<tc>, window_params = [{transform_indices = @transform_0, window_bounds = array<i64: 1, 272, 4>}, {pipeline_mode = #tpu.pipeline_mode<synchronous>, transform_indices = @transform_1, window_bounds = array<i64: 9, 4, 128>}, {pipeline_mode = #tpu.pipeline_mode<synchronous>, transform_indices = @transform_2, window_bounds = array<i64: 224, 1>}, {transform_indices = @transform_3, window_bounds = array<i64: 1, 224, 128>}, {transform_indices = @transform_4, window_bounds = array<i64: 1, 2, 128>}]} {
    %c0 = arith.constant 0 : index
    %c0_0 = arith.constant 0 : index
    %c0_1 = arith.constant 0 : index
    %0 = vector.load %arg1[%c0, %c0_0, %c0_1] : memref<1x272x4xbf16, #tpu.memory_space<vmem>>, vector<1x272x4xbf16>
    %1 = vector.shape_cast %0 : vector<1x272x4xbf16> to vector<272x4xbf16>
    %cst = arith.constant 0.000000e+00 : f32
    %2 = vector.broadcast %cst : f32 to vector<224x128xf32>
    %3 = vector.extract_strided_slice %1 {offsets = [0, 0], sizes = [224, 4], strides = [1, 1]} : vector<272x4xbf16> to vector<224x4xbf16>
    %c0_2 = arith.constant 0 : index
    %c0_3 = arith.constant 0 : index
    %c0_4 = arith.constant 0 : index
    %4 = vector.load %arg2[%c0_2, %c0_3, %c0_4] : memref<9x4x128xbf16, #tpu.memory_space<vmem>>, vector<1x4x128xbf16>
    %5 = vector.shape_cast %4 : vector<1x4x128xbf16> to vector<4x128xbf16>
    %cst_5 = arith.constant dense<0.000000e+00> : vector<224x128xf32>
    %6 = tpu.matmul %3, %5, %cst_5 {dimension_numbers = #tpu.dot_dimension_numbers<[1], [0], [0], [1], [0, 0, 1, 1], [], []>} : vector<224x4xbf16>, vector<4x128xbf16>, vector<224x128xf32> -> vector<224x128xf32>
    %7 = arith.addf %2, %6 : vector<224x128xf32>
    %8 = vector.extract_strided_slice %1 {offsets = [1, 0], sizes = [224, 4], strides = [1, 1]} : vector<272x4xbf16> to vector<224x4xbf16>
    %c1 = arith.constant 1 : index
    %c0_6 = arith.constant 0 : index
    %c0_7 = arith.constant 0 : index
    %9 = vector.load %arg2[%c1, %c0_6, %c0_7] : memref<9x4x128xbf16, #tpu.memory_space<vmem>>, vector<1x4x128xbf16>
    %10 = vector.shape_cast %9 : vector<1x4x128xbf16> to vector<4x128xbf16>
    %cst_8 = arith.constant dense<0.000000e+00> : vector<224x128xf32>
    %11 = tpu.matmul %8, %10, %cst_8 {dimension_numbers = #tpu.dot_dimension_numbers<[1], [0], [0], [1], [0, 0, 1, 1], [], []>} : vector<224x4xbf16>, vector<4x128xbf16>, vector<224x128xf32> -> vector<224x128xf32>
    %12 = arith.addf %7, %11 : vector<224x128xf32>
    %13 = vector.extract_strided_slice %1 {offsets = [2, 0], sizes = [224, 4], strides = [1, 1]} : vector<272x4xbf16> to vector<224x4xbf16>
    %c2 = arith.constant 2 : index
    %c0_9 = arith.constant 0 : index
    %c0_10 = arith.constant 0 : index
    %14 = vector.load %arg2[%c2, %c0_9, %c0_10] : memref<9x4x128xbf16, #tpu.memory_space<vmem>>, vector<1x4x128xbf16>
    %15 = vector.shape_cast %14 : vector<1x4x128xbf16> to vector<4x128xbf16>
    %cst_11 = arith.constant dense<0.000000e+00> : vector<224x128xf32>
    %16 = tpu.matmul %13, %15, %cst_11 {dimension_numbers = #tpu.dot_dimension_numbers<[1], [0], [0], [1], [0, 0, 1, 1], [], []>} : vector<224x4xbf16>, vector<4x128xbf16>, vector<224x128xf32> -> vector<224x128xf32>
    %17 = arith.addf %12, %16 : vector<224x128xf32>
    %18 = vector.extract_strided_slice %1 {offsets = [16, 0], sizes = [224, 4], strides = [1, 1]} : vector<272x4xbf16> to vector<224x4xbf16>
    %c3 = arith.constant 3 : index
    %c0_12 = arith.constant 0 : index
    %c0_13 = arith.constant 0 : index
    %19 = vector.load %arg2[%c3, %c0_12, %c0_13] : memref<9x4x128xbf16, #tpu.memory_space<vmem>>, vector<1x4x128xbf16>
    %20 = vector.shape_cast %19 : vector<1x4x128xbf16> to vector<4x128xbf16>
    %cst_14 = arith.constant dense<0.000000e+00> : vector<224x128xf32>
    %21 = tpu.matmul %18, %20, %cst_14 {dimension_numbers = #tpu.dot_dimension_numbers<[1], [0], [0], [1], [0, 0, 1, 1], [], []>} : vector<224x4xbf16>, vector<4x128xbf16>, vector<224x128xf32> -> vector<224x128xf32>
    %22 = arith.addf %17, %21 : vector<224x128xf32>
    %23 = vector.extract_strided_slice %1 {offsets = [17, 0], sizes = [224, 4], strides = [1, 1]} : vector<272x4xbf16> to vector<224x4xbf16>
    %c4 = arith.constant 4 : index
    %c0_15 = arith.constant 0 : index
    %c0_16 = arith.constant 0 : index
    %24 = vector.load %arg2[%c4, %c0_15, %c0_16] : memref<9x4x128xbf16, #tpu.memory_space<vmem>>, vector<1x4x128xbf16>
    %25 = vector.shape_cast %24 : vector<1x4x128xbf16> to vector<4x128xbf16>
    %cst_17 = arith.constant dense<0.000000e+00> : vector<224x128xf32>
    %26 = tpu.matmul %23, %25, %cst_17 {dimension_numbers = #tpu.dot_dimension_numbers<[1], [0], [0], [1], [0, 0, 1, 1], [], []>} : vector<224x4xbf16>, vector<4x128xbf16>, vector<224x128xf32> -> vector<224x128xf32>
    %27 = arith.addf %22, %26 : vector<224x128xf32>
    %28 = vector.extract_strided_slice %1 {offsets = [18, 0], sizes = [224, 4], strides = [1, 1]} : vector<272x4xbf16> to vector<224x4xbf16>
    %c5 = arith.constant 5 : index
    %c0_18 = arith.constant 0 : index
    %c0_19 = arith.constant 0 : index
    %29 = vector.load %arg2[%c5, %c0_18, %c0_19] : memref<9x4x128xbf16, #tpu.memory_space<vmem>>, vector<1x4x128xbf16>
    %30 = vector.shape_cast %29 : vector<1x4x128xbf16> to vector<4x128xbf16>
    %cst_20 = arith.constant dense<0.000000e+00> : vector<224x128xf32>
    %31 = tpu.matmul %28, %30, %cst_20 {dimension_numbers = #tpu.dot_dimension_numbers<[1], [0], [0], [1], [0, 0, 1, 1], [], []>} : vector<224x4xbf16>, vector<4x128xbf16>, vector<224x128xf32> -> vector<224x128xf32>
    %32 = arith.addf %27, %31 : vector<224x128xf32>
    %33 = vector.extract_strided_slice %1 {offsets = [32, 0], sizes = [224, 4], strides = [1, 1]} : vector<272x4xbf16> to vector<224x4xbf16>
    %c6 = arith.constant 6 : index
    %c0_21 = arith.constant 0 : index
    %c0_22 = arith.constant 0 : index
    %34 = vector.load %arg2[%c6, %c0_21, %c0_22] : memref<9x4x128xbf16, #tpu.memory_space<vmem>>, vector<1x4x128xbf16>
    %35 = vector.shape_cast %34 : vector<1x4x128xbf16> to vector<4x128xbf16>
    %cst_23 = arith.constant dense<0.000000e+00> : vector<224x128xf32>
    %36 = tpu.matmul %33, %35, %cst_23 {dimension_numbers = #tpu.dot_dimension_numbers<[1], [0], [0], [1], [0, 0, 1, 1], [], []>} : vector<224x4xbf16>, vector<4x128xbf16>, vector<224x128xf32> -> vector<224x128xf32>
    %37 = arith.addf %32, %36 : vector<224x128xf32>
    %38 = vector.extract_strided_slice %1 {offsets = [33, 0], sizes = [224, 4], strides = [1, 1]} : vector<272x4xbf16> to vector<224x4xbf16>
    %c7 = arith.constant 7 : index
    %c0_24 = arith.constant 0 : index
    %c0_25 = arith.constant 0 : index
    %39 = vector.load %arg2[%c7, %c0_24, %c0_25] : memref<9x4x128xbf16, #tpu.memory_space<vmem>>, vector<1x4x128xbf16>
    %40 = vector.shape_cast %39 : vector<1x4x128xbf16> to vector<4x128xbf16>
    %cst_26 = arith.constant dense<0.000000e+00> : vector<224x128xf32>
    %41 = tpu.matmul %38, %40, %cst_26 {dimension_numbers = #tpu.dot_dimension_numbers<[1], [0], [0], [1], [0, 0, 1, 1], [], []>} : vector<224x4xbf16>, vector<4x128xbf16>, vector<224x128xf32> -> vector<224x128xf32>
    %42 = arith.addf %37, %41 : vector<224x128xf32>
    %43 = vector.extract_strided_slice %1 {offsets = [34, 0], sizes = [224, 4], strides = [1, 1]} : vector<272x4xbf16> to vector<224x4xbf16>
    %c8 = arith.constant 8 : index
    %c0_27 = arith.constant 0 : index
    %c0_28 = arith.constant 0 : index
    %44 = vector.load %arg2[%c8, %c0_27, %c0_28] : memref<9x4x128xbf16, #tpu.memory_space<vmem>>, vector<1x4x128xbf16>
    %45 = vector.shape_cast %44 : vector<1x4x128xbf16> to vector<4x128xbf16>
    %cst_29 = arith.constant dense<0.000000e+00> : vector<224x128xf32>
    %46 = tpu.matmul %43, %45, %cst_29 {dimension_numbers = #tpu.dot_dimension_numbers<[1], [0], [0], [1], [0, 0, 1, 1], [], []>} : vector<224x4xbf16>, vector<4x128xbf16>, vector<224x128xf32> -> vector<224x128xf32>
    %47 = arith.addf %42, %46 : vector<224x128xf32>
    %48 = arith.truncf %47 : vector<224x128xf32> to vector<224x128xbf16>
    %c0_30 = arith.constant 0 : index
    %c0_31 = arith.constant 0 : index
    %c0_32 = arith.constant 0 : index
    %49 = vector.load %arg4[%c0_30, %c0_31, %c0_32] : memref<1x224x128xbf16, #tpu.memory_space<vmem>>, vector<1x224x128xbf16>
    %50 = vector.shape_cast %49 : vector<1x224x128xbf16> to vector<224x128xbf16>
    %51 = vector.shape_cast %48 : vector<224x128xbf16> to vector<1x224x128xbf16>
    tpu.vector_store %arg4[%c0_30, %c0_31, %c0_32], %51 {strides = array<i32>} : memref<1x224x128xbf16, #tpu.memory_space<vmem>>, vector<1x224x128xbf16>,
    %c0_33 = arith.constant 0 : index
    %c0_34 = arith.constant 0 : index
    %52 = vector.load %arg3[%c0_33, %c0_34] : memref<224x1xf32, #tpu.memory_space<vmem>>, vector<224x1xf32>
    %53 = vector.broadcast %52 : vector<224x1xf32> to vector<224x128xf32>
    %54 = arith.mulf %47, %53 : vector<224x128xf32>
    %cst_35 = arith.constant dense<0.000000e+00> : vector<128xf32>
    %55 = vector.multi_reduction <add>, %54, %cst_35 [0] : vector<224x128xf32> to vector<128xf32>
    %56 = vector.shape_cast %55 : vector<128xf32> to vector<1x128xf32>
    %cst_36 = arith.constant 0.00510204071 : f32
    %57 = vector.broadcast %cst_36 : f32 to vector<1x128xf32>
    %58 = arith.mulf %56, %57 : vector<1x128xf32>
    %59 = vector.broadcast %58 : vector<1x128xf32> to vector<224x128xf32>
    %60 = arith.subf %47, %59 : vector<224x128xf32>
    %61 = vector.broadcast %52 : vector<224x1xf32> to vector<224x128xf32>
    %62 = arith.mulf %60, %61 : vector<224x128xf32>
    %63 = arith.mulf %62, %62 : vector<224x128xf32>
    %cst_37 = arith.constant dense<0.000000e+00> : vector<128xf32>
    %64 = vector.multi_reduction <add>, %63, %cst_37 [0] : vector<224x128xf32> to vector<128xf32>
    %65 = vector.shape_cast %64 : vector<128xf32> to vector<1x128xf32>
    %66 = tpu.concatenate %56, %65 in 0 : vector<1x128xf32>, vector<1x128xf32> -> vector<2x128xf32>
    %c0_38 = arith.constant 0 : index
    %c0_39 = arith.constant 0 : index
    %c0_40 = arith.constant 0 : index
    %67 = vector.load %arg5[%c0_38, %c0_39, %c0_40] : memref<1x2x128xf32, #tpu.memory_space<vmem>>, vector<1x2x128xf32>
    %68 = vector.shape_cast %67 : vector<1x2x128xf32> to vector<2x128xf32>
    %69 = vector.shape_cast %66 : vector<2x128xf32> to vector<1x2x128xf32>
    tpu.vector_store %arg5[%c0_38, %c0_39, %c0_40], %69 {strides = array<i32>} : memref<1x2x128xf32, #tpu.memory_space<vmem>>, vector<1x2x128xf32>,
    return
  }
  func.func @transform_0(%arg0: i32) -> (i32, i32, i32) {
    %c0_i32 = arith.constant 0 : i32
    %c0_i32_0 = arith.constant 0 : i32
    %c0_i32_1 = arith.constant 0 : i32
    return %arg0, %c0_i32, %c0_i32_0 : i32, i32, i32
  }
  func.func @transform_1(%arg0: i32) -> (i32, i32, i32) {
    %c0_i32 = arith.constant 0 : i32
    %c0_i32_0 = arith.constant 0 : i32
    %c0_i32_1 = arith.constant 0 : i32
    %c0_i32_2 = arith.constant 0 : i32
    return %c0_i32, %c0_i32_0, %c0_i32_1 : i32, i32, i32
  }
  func.func @transform_2(%arg0: i32) -> (i32, i32) {
    %c0_i32 = arith.constant 0 : i32
    %c0_i32_0 = arith.constant 0 : i32
    %c0_i32_1 = arith.constant 0 : i32
    return %c0_i32, %c0_i32_0 : i32, i32
  }
  func.func @transform_3(%arg0: i32) -> (i32, i32, i32) {
    %c0_i32 = arith.constant 0 : i32
    %c0_i32_0 = arith.constant 0 : i32
    %c0_i32_1 = arith.constant 0 : i32
    return %arg0, %c0_i32, %c0_i32_0 : i32, i32, i32
  }
  func.func @transform_4(%arg0: i32) -> (i32, i32, i32) {
    %c0_i32 = arith.constant 0 : i32
    %c0_i32_0 = arith.constant 0 : i32
    %c0_i32_1 = arith.constant 0 : i32
    return %arg0, %c0_i32, %c0_i32_0 : i32, i32, i32
  }
}

</mosaic_0001>

<llo_original>
// kernel: tpu_custom_call.1
$region0: #{tpu_custom_call.1}
  #allocation0 [shape = 'u32[]', space=smem, size = 0x4, offset = 0x4, fixed_abs, tag = 'smem constant byte address 0x4 - core index']
  #allocation1 [shape = 'u32[144,128]{1,0:T(1,128)}', space=vmem, size = 0x12000, scoped, tag = 'internal scratch']
  %s0 = inlined_call_operand.hbm [shape: bf16[2,272,4], index: 0, kind: input, shape index: {}]
  %s1 = inlined_call_operand.hbm [shape: bf16[9,4,128], index: 1, kind: input, shape index: {}]
  %s2 = inlined_call_operand.hbm [shape: f32[224,1], index: 2, kind: input, shape index: {}]
  %s3 = inlined_call_operand.hbm [shape: bf16[2,224,128], index: 3, kind: output, shape index: {0}]
  %s4 = inlined_call_operand.hbm [shape: f32[2,2,128], index: 4, kind: output, shape index: {1}]
  %5 = xla_tuple %s3, %s4
  %s6 = sld [smem:[#allocation0]]
  $region65: #{tpu_custom_call.1} parent=0
    _
  %s8 = ssub.s32 1, %s6
  %s9 = scalar_select 0, %s8, %s6
  $region1: #{tpu_custom_call.1} parent=0
    #allocation2 [shape = 'u8[139264]{0}', space=vmem, size = 0x22000, scoped, tag = 'input window, operand 0']
    #allocation3 [shape = 's32[2]{0}', space=sflag, size = 0x8, scoped, tag = 'scoped memory for tpu_custom_call.1']
    #allocation4 [shape = 's32[2]{0}', space=sflag, size = 0x8, scoped, tag = 'scoped memory for tpu_custom_call.1']
    #allocation5 [shape = 'u8[9216]{0}', space=vmem, size = 0x2400, scoped, tag = 'input window, operand 1, single buffered']
    #allocation6 [shape = 's32[1]{0}', space=sflag, size = 0x4, scoped, tag = 'scoped memory for tpu_custom_call.1']
    #allocation7 [shape = 'u8[114688]{0}', space=vmem, size = 0x1c000, scoped, tag = 'input window, operand 2, single buffered']
    #allocation8 [shape = 'u8[114688]{0}', space=vmem, size = 0x1c000, scoped, tag = 'output window, operand 0']
    #allocation9 [shape = 'u8[2048]{0}', space=vmem, size = 0x800, scoped, tag = 'output window, operand 1']
    #allocation10 [shape = 's32[2]{0}', space=sflag, size = 0x8, scoped, tag = 'scoped memory for tpu_custom_call.1']
    %10 = vsyncpa [#allocation3], 0
    %s11 = scalar_lea.sflag [#allocation3], 1
    %12 = vsyncpa %s11, 0
    %13 = vsyncpa [#allocation6], 0
    %14 = vsyncpa [#allocation4], 0
    %s15 = scalar_lea.sflag [#allocation4], 1
    %16 = vsyncpa %s15, 0
    %17 = vsyncpa [#allocation10], 0
    %s18 = scalar_lea.sflag [#allocation10], 1
    %19 = vsyncpa %s18, 0
    loop: start=0, step=1, limit=4
    $region2: #{tpu_custom_call.1} parent=1 // loop_pre_header
      _
    $region3: #{tpu_custom_call.1} parent=1 // loop_header
      %s21 = sphi 0, %s25
      %p22 = scmp.ge.s32.totalorder %s21, 4
      %s31 = sphi 0, %s33
      %s34 = sphi 0, %s31
      %s35 = sphi 0, %s34
      %s51 = sphi 0, %s35
      %s55 = sphi 0, %s55
      %s57 = sphi 0, %s55
      %s58 = sphi 0, %s57
      %s72 = sphi 0, %s58
      %s76 = sphi 0, %s76
      %s78 = sphi 0, %s76
      %s79 = sphi 0, %s78
      %s93 = sphi 0, %s79
      %s99 = sphi 0, %s101
      %s102 = sphi 0, %s99
      %s103 = sphi 0, %s102
      %s119 = sphi 0, %s103
      %s125 = sphi 0, %s127
      %s128 = sphi 0, %s125
      %s129 = sphi 0, %s128
      %s145 = sphi 0, %s129
    $region4: #{tpu_custom_call.1} parent=1 // loop_header_branch
      %24 = sbr.rel (%p22) target = $region8
    $region5: #{tpu_custom_call.1} parent=1 // loop_body
      %s26 = ssub.s32 %s21, 1
      %s27 = ssub.s32 %s21, 2
      %s28 = sadd.s32 %s21, 1
      %s29 = ssub.s32 %s21, %s28
      %p30 = scmp.eq.s32.totalorder %s29, 0
      %s32 = sadd.s32 %s31, 1
      %s33 = scalar_select %p30, %s31, %s32
      %p36 = pneg %p30
      %p37 = scmp.eq.s32.totalorder %s21, 1
      %p38 = por %p36, %p37
      %p39 = scmp.ne.s32.totalorder %s31, %s34
      %p40 = scmp.eq.s32.totalorder %s21, 0
      %p41 = por %p39, %p40
      %p42 = scmp.ne.s32.totalorder %s31, %s34
      %p43 = scmp.eq.s32.totalorder %s26, 1
      %p44 = por %p42, %p43
      %p45 = scmp.ne.s32.totalorder %s34, %s35
      %p46 = scmp.eq.s32.totalorder %s26, 0
      %p47 = por %p45, %p46
      %p48 = scmp.ne.s32.totalorder %s34, %s35
      %p49 = scmp.eq.s32.totalorder %s27, 1
      %p50 = por %p48, %p49
      %p52 = scmp.ne.s32.totalorder %s35, %s51
      %p53 = scmp.eq.s32.totalorder %s27, 0
      %p54 = por %p52, %p53
      %s56 = sadd.s32 %s55, 1
      %p59 = scmp.eq.s32.totalorder %s21, 1
      %p60 = scmp.ne.s32.totalorder %s55, %s57
      %p61 = scmp.eq.s32.totalorder %s21, 0
      %p62 = por %p60, %p61
      %p63 = scmp.ne.s32.totalorder %s55, %s57
      %p64 = scmp.eq.s32.totalorder %s26, 1
      %p65 = por %p63, %p64
      %p66 = scmp.ne.s32.totalorder %s57, %s58
      %p67 = scmp.eq.s32.totalorder %s26, 0
      %p68 = por %p66, %p67
      %p69 = scmp.ne.s32.totalorder %s57, %s58
      %p70 = scmp.eq.s32.totalorder %s27, 1
      %p71 = por %p69, %p70
      %p73 = scmp.ne.s32.totalorder %s58, %s72
      %p74 = scmp.eq.s32.totalorder %s27, 0
      %p75 = por %p73, %p74
      %s77 = sadd.s32 %s76, 1
      %p80 = scmp.eq.s32.totalorder %s21, 1
      %p81 = scmp.ne.s32.totalorder %s76, %s78
      %p82 = scmp.eq.s32.totalorder %s21, 0
      %p83 = por %p81, %p82
      %p84 = scmp.ne.s32.totalorder %s76, %s78
      %p85 = scmp.eq.s32.totalorder %s26, 1
      %p86 = por %p84, %p85
      %p87 = scmp.ne.s32.totalorder %s78, %s79
      %p88 = scmp.eq.s32.totalorder %s26, 0
      %p89 = por %p87, %p88
      %p90 = scmp.ne.s32.totalorder %s78, %s79
      %p91 = scmp.eq.s32.totalorder %s27, 1
      %p92 = por %p90, %p91
      %p94 = scmp.ne.s32.totalorder %s79, %s93
      %p95 = scmp.eq.s32.totalorder %s27, 0
      %p96 = por %p94, %p95
      %s97 = ssub.s32 %s21, %s28
      %p98 = scmp.eq.s32.totalorder %s97, 0
      %s100 = sadd.s32 %s99, 1
      %s101 = scalar_select %p98, %s99, %s100
      %p104 = pneg %p98
      %p105 = scmp.eq.s32.totalorder %s21, 1
      %p106 = por %p104, %p105
      %p107 = scmp.ne.s32.totalorder %s99, %s102
      %p108 = scmp.eq.s32.totalorder %s21, 0
      %p109 = por %p107, %p108
      %p110 = scmp.ne.s32.totalorder %s99, %s102
      %p111 = scmp.eq.s32.totalorder %s26, 1
      %p112 = por %p110, %p111
      %p113 = scmp.ne.s32.totalorder %s102, %s103
      %p114 = scmp.eq.s32.totalorder %s26, 0
      %p115 = por %p113, %p114
      %p116 = scmp.ne.s32.totalorder %s102, %s103
      %p117 = scmp.eq.s32.totalorder %s27, 1
      %p118 = por %p116, %p117
      %p120 = scmp.ne.s32.totalorder %s103, %s119
      %p121 = scmp.eq.s32.totalorder %s27, 0
      %p122 = por %p120, %p121
      %s123 = ssub.s32 %s21, %s28
      %p124 = scmp.eq.s32.totalorder %s123, 0
      %s126 = sadd.s32 %s125, 1
      %s127 = scalar_select %p124, %s125, %s126
      %p130 = pneg %p124
      %p131 = scmp.eq.s32.totalorder %s21, 1
      %p132 = por %p130, %p131
      %p133 = scmp.ne.s32.totalorder %s125, %s128
      %p134 = scmp.eq.s32.totalorder %s21, 0
      %p135 = por %p133, %p134
      %p136 = scmp.ne.s32.totalorder %s125, %s128
      %p137 = scmp.eq.s32.totalorder %s26, 1
      %p138 = por %p136, %p137
      %p139 = scmp.ne.s32.totalorder %s128, %s129
      %p140 = scmp.eq.s32.totalorder %s26, 0
      %p141 = por %p139, %p140
      %p142 = scmp.ne.s32.totalorder %s128, %s129
      %p143 = scmp.eq.s32.totalorder %s27, 1
      %p144 = por %p142, %p143
      %p146 = scmp.ne.s32.totalorder %s129, %s145
      %p147 = scmp.eq.s32.totalorder %s27, 0
      %p148 = por %p146, %p147
      %p149 = scmp.le.s32.totalorder 1, %s21
      %p150 = scmp.lt.s32.totalorder %s21, 3
      %p151 = pnand %p149, %p150
      %p152 = pneg %p151
      // Predicated region
      $region9: #{tpu_custom_call.1} parent=5 // pred_check
        _
      $region10: #{tpu_custom_call.1} parent=5 // pred_check_branch
        %154 = sbr.rel (%p151) target = $region12
      $region11: #{tpu_custom_call.1} parent=5 // pred_region
        %s155 = ssub.s32 %s21, 1
        // Predicated region
        $region13: #{tpu_custom_call.1} parent=11 // pred_check
          %p156 = pneg %p68
        $region14: #{tpu_custom_call.1} parent=11 // pred_check_branch
          %158 = sbr.rel (%p156) target = $region16
        $region15: #{tpu_custom_call.1} parent=11 // pred_region
          %s160 = ssub.s32 288, 288
          %161 = vsyncadd [#allocation6], %s160
          %s162 = sshll.u32 [#allocation5], 4
          %s163 = int_to_ptr.vmem [resolvable:$true] %s162
          %168 = dma.hbm_to_vmem [thread:$0]  %s1, 288, %s163, [#allocation6], 32, 32, 2
        $region16: #{tpu_custom_call.1} parent=11 // pred_fallthru
          _
        // Predicated region
        $region17: #{tpu_custom_call.1} parent=11 // pred_check
          %p169 = pneg %p89
        $region18: #{tpu_custom_call.1} parent=11 // pred_check_branch
          %171 = sbr.rel (%p169) target = $region20
        $region19: #{tpu_custom_call.1} parent=11 // pred_region
          %s173 = ssub.s32 3584, 3584
          %174 = vsyncadd [#allocation6], %s173
          %s175 = sshll.u32 [#allocation7], 4
          %s176 = int_to_ptr.vmem [resolvable:$true] %s175
          %181 = dma.hbm_to_vmem [thread:$0]  %s2, 3584, %s176, [#allocation6], 128, 128, 8
        $region20: #{tpu_custom_call.1} parent=11 // pred_fallthru
          _
      $region12: #{tpu_custom_call.1} parent=5 // pred_fallthru
        _
      %p182 = scmp.lt.s32.totalorder %s21, 2
      // Predicated region
      $region21: #{tpu_custom_call.1} parent=5 // pred_check
        %p183 = pneg %p182
      $region22: #{tpu_custom_call.1} parent=5 // pred_check_branch
        %185 = sbr.rel (%p183) target = $region24
      $region23: #{tpu_custom_call.1} parent=5 // pred_region
        // Predicated region
        $region25: #{tpu_custom_call.1} parent=23 // pred_check
          %p186 = pneg %p41
        $region26: #{tpu_custom_call.1} parent=23 // pred_check_branch
          %188 = sbr.rel (%p186) target = $region28
        $region27: #{tpu_custom_call.1} parent=23 // pred_region
          %s189 = sand.u32 %s31, 1
          %s190 = scalar_lea.sflag [#allocation3], %s189
          %s191 = sand.u32 %s31, 1
          %s192 = smul.addr %s191, 136
          %s193 = scalar_lea.vmem [#allocation2], %s192
          %s195 = ssub.s32 2176, 2176
          %196 = vsyncadd %s190, %s195
          %s197 = smul.addr %s21, 34
          %s198 = smul.addr %s197, 64
          %s199 = scalar_lea.hbm %s0, %s198
          %s200 = sshll.u32 %s193, 4
          %s201 = int_to_ptr.vmem [resolvable:$true] %s200
          %206 = dma.hbm_to_vmem [thread:$0]  %s199, 2176, %s201, %s190, 64, 64, 4
        $region28: #{tpu_custom_call.1} parent=23 // pred_fallthru
          _
      $region24: #{tpu_custom_call.1} parent=5 // pred_fallthru
        _
      %p207 = scmp.le.s32.totalorder 1, %s21
      %p208 = scmp.lt.s32.totalorder %s21, 3
      %p209 = pnand %p207, %p208
      %p210 = pneg %p209
      // Predicated region
      $region29: #{tpu_custom_call.1} parent=5 // pred_check
        _
      $region30: #{tpu_custom_call.1} parent=5 // pred_check_branch
        %212 = sbr.rel (%p209) target = $region32
      $region31: #{tpu_custom_call.1} parent=5 // pred_region
        %s213 = ssub.s32 %s21, 1
        %s214 = sand.u32 %s34, 1
        %s215 = scalar_lea.sflag [#allocation3], %s214
        %s216 = sand.u32 %s34, 1
        %s217 = smul.addr %s216, 136
        %s218 = scalar_lea.vmem [#allocation2], %s217
        // Predicated region
        $region33: #{tpu_custom_call.1} parent=31 // pred_check
          %p219 = pneg %p47
        $region34: #{tpu_custom_call.1} parent=31 // pred_check_branch
          %221 = sbr.rel (%p219) target = $region36
        $region35: #{tpu_custom_call.1} parent=31 // pred_region
          %222 = dma.done %s215, 2176
        $region36: #{tpu_custom_call.1} parent=31 // pred_fallthru
          _
        // Predicated region
        $region37: #{tpu_custom_call.1} parent=31 // pred_check
          %p223 = pneg %p68
        $region38: #{tpu_custom_call.1} parent=31 // pred_check_branch
          %225 = sbr.rel (%p223) target = $region40
        $region39: #{tpu_custom_call.1} parent=31 // pred_region
          %226 = dma.done [#allocation6], 288
        $region40: #{tpu_custom_call.1} parent=31 // pred_fallthru
          _
        // Predicated region
        $region41: #{tpu_custom_call.1} parent=31 // pred_check
          %p227 = pneg %p89
        $region42: #{tpu_custom_call.1} parent=31 // pred_check_branch
          %229 = sbr.rel (%p227) target = $region44
        $region43: #{tpu_custom_call.1} parent=31 // pred_region
          %230 = dma.done [#allocation6], 3584
        $region44: #{tpu_custom_call.1} parent=31 // pred_fallthru
          _
        %s231 = sand.u32 %s34, 1
        %s232 = scalar_lea.sflag [#allocation3], %s231
        %s233 = sand.u32 %s34, 1
        %s234 = smul.addr %s233, 136
        %s235 = scalar_lea.vmem [#allocation2], %s234
        %p236 = pneg %p47
        %p237 = pneg %p44
        %p238 = pneg %p68
        %p239 = pneg %p65
        %p240 = pneg %p89
        %p241 = pneg %p86
        %p242 = pneg %p115
        %p243 = pneg %p112
        %s244 = sand.u32 %s102, 1
        %s245 = scalar_lea.sflag [#allocation4], %s244
        %s246 = sand.u32 %s102, 1
        %s247 = smul.addr %s246, 112
        %s248 = scalar_lea.vmem [#allocation8], %s247
        %p249 = pneg %p141
        %p250 = pneg %p138
        %s251 = sand.u32 %s128, 1
        %s252 = scalar_lea.sflag [#allocation10], %s251
        %s253 = sand.u32 %s128, 1
        %s254 = smul.addr %s253, 2
        %s255 = scalar_lea.vmem [#allocation9], %s254
        %v257 = vld [vmem:[%s218] sm:$0xf]
        %v258 = vld [vmem:[%s218 + $0x4] sm:$0xf]
        %v259 = vld [vmem:[%s218 + $0x8] sm:$0xf]
        %v260 = vld [vmem:[%s218 + $0xc] sm:$0xf]
        %v261 = vld [vmem:[%s218 + $0x10] sm:$0xf]
        %v262 = vld [vmem:[%s218 + $0x14] sm:$0xf]
        %v263 = vld [vmem:[%s218 + $0x18] sm:$0xf]
        %v264 = vld [vmem:[%s218 + $0x1c] sm:$0xf]
        %v265 = vld [vmem:[%s218 + $0x20] sm:$0xf]
        %v266 = vld [vmem:[%s218 + $0x24] sm:$0xf]
        %v267 = vld [vmem:[%s218 + $0x28] sm:$0xf]
        %v268 = vld [vmem:[%s218 + $0x2c] sm:$0xf]
        %v269 = vld [vmem:[%s218 + $0x30] sm:$0xf]
        %v270 = vld [vmem:[%s218 + $0x34] sm:$0xf]
        %v271 = vld [vmem:[%s218 + $0x38] sm:$0xf]
        %v272 = vld [vmem:[%s218 + $0x3c] sm:$0xf]
        %v273 = vld [vmem:[%s218 + $0x40] sm:$0xf]
        %v274 = vld [vmem:[%s218 + $0x44] sm:$0xf]
        %v275 = vld [vmem:[%s218 + $0x48] sm:$0xf]
        %v276 = vld [vmem:[%s218 + $0x4c] sm:$0xf]
        %v277 = vld [vmem:[%s218 + $0x50] sm:$0xf]
        %v278 = vld [vmem:[%s218 + $0x54] sm:$0xf]
        %v279 = vld [vmem:[%s218 + $0x58] sm:$0xf]
        %v280 = vld [vmem:[%s218 + $0x5c] sm:$0xf]
        %v281 = vld [vmem:[%s218 + $0x60] sm:$0xf]
        %v282 = vld [vmem:[%s218 + $0x64] sm:$0xf]
        %v283 = vld [vmem:[%s218 + $0x68] sm:$0xf]
        %v284 = vld [vmem:[%s218 + $0x6c] sm:$0xf]
        %v285 = vld [vmem:[%s218 + $0x70] sm:$0xf]
        %v286 = vld [vmem:[%s218 + $0x74] sm:$0xf]
        %v287 = vld [vmem:[%s218 + $0x78] sm:$0xf]
        %v288 = vld [vmem:[%s218 + $0x7c] sm:$0xf]
        %v289 = vld [vmem:[%s218 + $0x80] sm:$0xf]
        %v290 = vld [vmem:[#allocation5] sm:$0x3]
        %s291 = scalar_lea.vmem [#allocation5], 2
        %v292 = vld [vmem:[%s291] sm:$0x3]
        %v322 = vunpack.c.l.b16 %v257
        %v323 = vunpack.c.l.b16 %v258
        %v324 = vunpack.c.l.b16 %v259
        %v325 = vunpack.c.l.b16 %v260
        %v326 = vunpack.c.l.b16 %v261
        %v327 = vunpack.c.l.b16 %v262
        %v328 = vunpack.c.l.b16 %v263
        %v329 = vunpack.c.l.b16 %v264
        %v330 = vunpack.c.l.b16 %v265
        %v331 = vunpack.c.l.b16 %v266
        %v332 = vunpack.c.l.b16 %v267
        %v333 = vunpack.c.l.b16 %v268
        %v334 = vunpack.c.l.b16 %v269
        %v335 = vunpack.c.l.b16 %v270
        %v336 = vunpack.c.l.b16 %v271
        %v337 = vunpack.c.l.b16 %v272
        %v338 = vunpack.c.l.b16 %v273
        %v339 = vunpack.c.l.b16 %v274
        %v340 = vunpack.c.l.b16 %v275
        %v341 = vunpack.c.l.b16 %v276
        %v342 = vunpack.c.l.b16 %v277
        %v343 = vunpack.c.l.b16 %v278
        %v344 = vunpack.c.l.b16 %v279
        %v345 = vunpack.c.l.b16 %v280
        %v346 = vunpack.c.l.b16 %v281
        %v347 = vunpack.c.l.b16 %v282
        %v348 = vunpack.c.l.b16 %v283
        %v349 = vunpack.c.l.b16 %v284
        %v350 = vunpack.c.l.b16 %v285
        %v351 = vpack.c.b16 %v323, %v322
        %v352 = vpack.c.b16 %v325, %v324
        %v353 = vpack.c.b16 %v327, %v326
        %v354 = vpack.c.b16 %v329, %v328
        %v355 = vpack.c.b16 %v331, %v330
        %v356 = vpack.c.b16 %v333, %v332
        %v357 = vpack.c.b16 %v335, %v334
        %v358 = vpack.c.b16 %v337, %v336
        %v359 = vpack.c.b16 %v339, %v338
        %v360 = vpack.c.b16 %v341, %v340
        %v361 = vpack.c.b16 %v343, %v342
        %v362 = vpack.c.b16 %v345, %v344
        %v363 = vpack.c.b16 %v347, %v346
        %v364 = vpack.c.b16 %v349, %v348
        %v365 = vpack.c.b16 %v350, %v350
        %vm366 = vsmask.f32 7424
        %v368 = vshrl.u32 %v351, 16
        %v370 = vshll.u32 %v351, 16
        %v372 = vrot.slane %v370, 1
        %v373 = vor.u32 %v368, %v372
        %v375 = vshll.u32 %v352, 16
        %v377 = vrot.slane %v375, 1
        %v378 = vsel %vm366, %v373, %v377
        %v379 = vshrl.u32 %v352, 16
        %v381 = vor.u32 %v379, %v377
        %v383 = vshll.u32 %v353, 16
        %v385 = vrot.slane %v383, 1
        %v386 = vsel %vm366, %v381, %v385
        %v387 = vshrl.u32 %v353, 16
        %v389 = vor.u32 %v387, %v385
        %v391 = vshll.u32 %v354, 16
        %v393 = vrot.slane %v391, 1
        %v394 = vsel %vm366, %v389, %v393
        %v395 = vshrl.u32 %v354, 16
        %v397 = vor.u32 %v395, %v393
        %v399 = vshll.u32 %v355, 16
        %v401 = vrot.slane %v399, 1
        %v402 = vsel %vm366, %v397, %v401
        %v403 = vshrl.u32 %v355, 16
        %v405 = vor.u32 %v403, %v401
        %v407 = vshll.u32 %v356, 16
        %v409 = vrot.slane %v407, 1
        %v410 = vsel %vm366, %v405, %v409
        %v411 = vshrl.u32 %v356, 16
        %v413 = vor.u32 %v411, %v409
        %v415 = vshll.u32 %v357, 16
        %v417 = vrot.slane %v415, 1
        %v418 = vsel %vm366, %v413, %v417
        %v419 = vshrl.u32 %v357, 16
        %v421 = vor.u32 %v419, %v417
        %v423 = vshll.u32 %v358, 16
        %v425 = vrot.slane %v423, 1
        %v426 = vsel %vm366, %v421, %v425
        %v427 = vshrl.u32 %v358, 16
        %v429 = vor.u32 %v427, %v425
        %v431 = vshll.u32 %v359, 16
        %v433 = vrot.slane %v431, 1
        %v434 = vsel %vm366, %v429, %v433
        %v435 = vshrl.u32 %v359, 16
        %v437 = vor.u32 %v435, %v433
        %v439 = vshll.u32 %v360, 16
        %v441 = vrot.slane %v439, 1
        %v442 = vsel %vm366, %v437, %v441
        %v443 = vshrl.u32 %v360, 16
        %v445 = vor.u32 %v443, %v441
        %v447 = vshll.u32 %v361, 16
        %v449 = vrot.slane %v447, 1
        %v450 = vsel %vm366, %v445, %v449
        %v451 = vshrl.u32 %v361, 16
        %v453 = vor.u32 %v451, %v449
        %v455 = vshll.u32 %v362, 16
        %v457 = vrot.slane %v455, 1
        %v458 = vsel %vm366, %v453, %v457
        %v459 = vshrl.u32 %v362, 16
        %v461 = vor.u32 %v459, %v457
        %v463 = vshll.u32 %v363, 16
        %v465 = vrot.slane %v463, 1
        %v466 = vsel %vm366, %v461, %v465
        %v467 = vshrl.u32 %v363, 16
        %v469 = vor.u32 %v467, %v465
        %v471 = vshll.u32 %v364, 16
        %v473 = vrot.slane %v471, 1
        %v474 = vsel %vm366, %v469, %v473
        %v475 = vshrl.u32 %v364, 16
        %v477 = vor.u32 %v475, %v473
        %v479 = vshll.u32 %v365, 16
        %v481 = vrot.slane %v479, 1
        %v482 = vsel %vm366, %v477, %v481
        %vm483 = vcmask 31744
        %v485 = vsel %vm483, %v378, 0
        %v488 = vsel %vm483, %v386, 0
        %v491 = vsel %vm483, %v394, 0
        %v494 = vsel %vm483, %v402, 0
        %v497 = vsel %vm483, %v410, 0
        %v500 = vsel %vm483, %v418, 0
        %v503 = vsel %vm483, %v426, 0
        %v506 = vsel %vm483, %v434, 0
        %v509 = vsel %vm483, %v442, 0
        %v512 = vsel %vm483, %v450, 0
        %v515 = vsel %vm483, %v458, 0
        %v518 = vsel %vm483, %v466, 0
        %v521 = vsel %vm483, %v474, 0
        %v524 = vsel %vm483, %v482, 0
        %vm526 = vcmask 1041408
        %v528 = vsel %vm526, %v292, 0
        %530 = vmatprep.subr.bf16.mxu0 0
        %531 = vmatpush1.bf16.msra.mxu0 %v528
        %532 = vmatprep.subr.bf16.mxu0 0
        %533 = vmatpush1.bf16.msra.mxu0 0
        %534 = vmatprep.subr.bf16.mxu0 0
        %535 = vmatpush1.bf16.msra.mxu0 0
        %536 = vmatprep.subr.bf16.mxu0 0
        %537 = vmatpush1.bf16.msra.mxu0 0
        %538 = vmatprep.subr.bf16.mxu0 0
        %539 = vmatpush1.bf16.msra.mxu0 0
        %540 = vmatprep.subr.bf16.mxu0 0
        %541 = vmatpush1.bf16.msra.mxu0 0
        %542 = vmatprep.subr.bf16.mxu0 0
        %543 = vmatpush1.bf16.msra.mxu0 0
        %544 = vmatprep.subr.bf16.mxu0 0
        %545 = vmatpush1.bf16.msra.mxu0 0
        %546 = vmatprep.subr.bf16.mxu0 0
        %547 = vmatpush1.bf16.msra.mxu0 0
        %548 = vmatprep.subr.bf16.mxu0 0
        %549 = vmatpush1.bf16.msra.mxu0 0
        %550 = vmatprep.subr.bf16.mxu0 0
        %551 = vmatpush1.bf16.msra.mxu0 0
        %552 = vmatprep.subr.bf16.mxu0 0
        %553 = vmatpush1.bf16.msra.mxu0 0
        %554 = vmatprep.subr.bf16.mxu0 0
        %555 = vmatpush1.bf16.msra.mxu0 0
        %556 = vmatprep.subr.bf16.mxu0 0
        %557 = vmatpush1.bf16.msra.mxu0 0
        %558 = vmatprep.subr.bf16.mxu0 0
        %559 = vmatpush1.bf16.msra.mxu0 0
        %560 = vmatprep.subr.bf16.mxu0 0
        %561 = vmatpush1.bf16.msra.mxu0 0
        %562 = vmatprep.mubr.bf16.mxu0 0
        %563 = vmatmul.mubr.bf16.gmra.mrb[0].mxu0 %v485
        %v564 = vpop.f32.mrb[0].mxu0
        %v565 = vadd.f32 0.0, %v564
        %v566 = vpop.f32.mrb[0].mxu0
        %v567 = vpop.f32.mrb[0].mxu0
        %v568 = vadd.f32 0.0, %v567
        %v569 = vpop.f32.mrb[0].mxu0
        %570 = vmatprep.mubr.bf16.mxu0 0
        %571 = vmatmul.mubr.bf16.gmra.mrb[0].mxu0 %v488
        %v572 = vpop.f32.mrb[0].mxu0
        %v573 = vadd.f32 0.0, %v572
        %v574 = vpop.f32.mrb[0].mxu0
        %v575 = vpop.f32.mrb[0].mxu0
        %v576 = vadd.f32 0.0, %v575
        %v577 = vpop.f32.mrb[0].mxu0
        %578 = vmatprep.mubr.bf16.mxu0 0
        %579 = vmatmul.mubr.bf16.gmra.mrb[0].mxu0 %v491
        %v580 = vpop.f32.mrb[0].mxu0
        %v581 = vadd.f32 0.0, %v580
        %v582 = vpop.f32.mrb[0].mxu0
        %v583 = vpop.f32.mrb[0].mxu0
        %v584 = vadd.f32 0.0, %v583
        %v585 = vpop.f32.mrb[0].mxu0
        %586 = vmatprep.mubr.bf16.mxu0 0
        %587 = vmatmul.mubr.bf16.gmra.mrb[0].mxu0 %v494
        %v588 = vpop.f32.mrb[0].mxu0
        %v589 = vadd.f32 0.0, %v588
        %v590 = vpop.f32.mrb[0].mxu0
        %v591 = vpop.f32.mrb[0].mxu0
        %v592 = vadd.f32 0.0, %v591
        %v593 = vpop.f32.mrb[0].mxu0
        %594 = vmatprep.mubr.bf16.mxu0 0
        %595 = vmatmul.mubr.bf16.gmra.mrb[0].mxu0 %v497
        %v596 = vpop.f32.mrb[0].mxu0
        %v597 = vadd.f32 0.0, %v596
        %v598 = vpop.f32.mrb[0].mxu0
        %v599 = vpop.f32.mrb[0].mxu0
        %v600 = vadd.f32 0.0, %v599
        %v601 = vpop.f32.mrb[0].mxu0
        %602 = vmatprep.mubr.bf16.mxu0 0
        %603 = vmatmul.mubr.bf16.gmra.mrb[0].mxu0 %v500
        %v604 = vpop.f32.mrb[0].mxu0
        %v605 = vadd.f32 0.0, %v604
        %v606 = vpop.f32.mrb[0].mxu0
        %v607 = vpop.f32.mrb[0].mxu0
        %v608 = vadd.f32 0.0, %v607
        %v609 = vpop.f32.mrb[0].mxu0
        %610 = vmatprep.mubr.bf16.mxu0 0
        %611 = vmatmul.mubr.bf16.gmra.mrb[0].mxu0 %v503
        %v612 = vpop.f32.mrb[0].mxu0
        %v613 = vadd.f32 0.0, %v612
        %v614 = vpop.f32.mrb[0].mxu0
        %v615 = vpop.f32.mrb[0].mxu0
        %v616 = vadd.f32 0.0, %v615
        %v617 = vpop.f32.mrb[0].mxu0
        %618 = vmatprep.mubr.bf16.mxu0 0
        %619 = vmatmul.mubr.bf16.gmra.mrb[0].mxu0 %v506
        %v620 = vpop.f32.mrb[0].mxu0
        %v621 = vadd.f32 0.0, %v620
        %v622 = vpop.f32.mrb[0].mxu0
        %v623 = vpop.f32.mrb[0].mxu0
        %v624 = vadd.f32 0.0, %v623
        %v625 = vpop.f32.mrb[0].mxu0
        %626 = vmatprep.mubr.bf16.mxu0 0
        %627 = vmatmul.mubr.bf16.gmra.mrb[0].mxu0 %v509
        %v628 = vpop.f32.mrb[0].mxu0
        %v629 = vadd.f32 0.0, %v628
        %v630 = vpop.f32.mrb[0].mxu0
        %v631 = vpop.f32.mrb[0].mxu0
        %v632 = vadd.f32 0.0, %v631
        %v633 = vpop.f32.mrb[0].mxu0
        %634 = vmatprep.mubr.bf16.mxu0 0
        %635 = vmatmul.mubr.bf16.gmra.mrb[0].mxu0 %v512
        %v636 = vpop.f32.mrb[0].mxu0
        %v637 = vadd.f32 0.0, %v636
        %v638 = vpop.f32.mrb[0].mxu0
        %v639 = vpop.f32.mrb[0].mxu0
        %v640 = vadd.f32 0.0, %v639
        %v641 = vpop.f32.mrb[0].mxu0
        %642 = vmatprep.mubr.bf16.mxu0 0
        %643 = vmatmul.mubr.bf16.gmra.mrb[0].mxu0 %v515
        %v644 = vpop.f32.mrb[0].mxu0
        %v645 = vadd.f32 0.0, %v644
        %v646 = vpop.f32.mrb[0].mxu0
        %v647 = vpop.f32.mrb[0].mxu0
        %v648 = vadd.f32 0.0, %v647
        %v649 = vpop.f32.mrb[0].mxu0
        %650 = vmatprep.mubr.bf16.mxu0 0
        %651 = vmatmul.mubr.bf16.gmra.mrb[0].mxu0 %v518
        %v652 = vpop.f32.mrb[0].mxu0
        %v653 = vadd.f32 0.0, %v652
        %v654 = vpop.f32.mrb[0].mxu0
        %v655 = vpop.f32.mrb[0].mxu0
        %v656 = vadd.f32 0.0, %v655
        %v657 = vpop.f32.mrb[0].mxu0
        %658 = vmatprep.mubr.bf16.mxu0 0
        %659 = vmatmul.mubr.bf16.gmra.mrb[0].mxu0 %v521
        %v660 = vpop.f32.mrb[0].mxu0
        %v661 = vadd.f32 0.0, %v660
        %v662 = vpop.f32.mrb[0].mxu0
        %v663 = vpop.f32.mrb[0].mxu0
        %v664 = vadd.f32 0.0, %v663
        %v665 = vpop.f32.mrb[0].mxu0
        %666 = vmatprep.mubr.bf16.mxu0 0
        %667 = vmatmul.mubr.bf16.gmra.mrb[0].mxu0 %v524
        %v668 = vpop.f32.mrb[0].mxu0
        %v669 = vadd.f32 0.0, %v668
        %v670 = vpop.f32.mrb[0].mxu0
        %v671 = vpop.f32.mrb[0].mxu0
        %v672 = vadd.f32 0.0, %v671
        %v673 = vpop.f32.mrb[0].mxu0
        %674 = vdwg.mxu0
        %v675 = vsel %vm483, %v351, 0
        %v677 = vsel %vm483, %v352, 0
        %v679 = vsel %vm483, %v353, 0
        %v681 = vsel %vm483, %v354, 0
        %v683 = vsel %vm483, %v355, 0
        %v685 = vsel %vm483, %v356, 0
        %v687 = vsel %vm483, %v357, 0
        %v689 = vsel %vm483, %v358, 0
        %v691 = vsel %vm483, %v359, 0
        %v693 = vsel %vm483, %v360, 0
        %v695 = vsel %vm483, %v361, 0
        %v697 = vsel %vm483, %v362, 0
        %v699 = vsel %vm483, %v363, 0
        %v701 = vsel %vm483, %v364, 0
        %v704 = vsel %vm526, %v290, 0
        %706 = vmatprep.subr.bf16.mxu0 0
        %707 = vmatpush1.bf16.msra.mxu0 %v704
        %708 = vmatprep.subr.bf16.mxu0 0
        %709 = vmatpush1.bf16.msra.mxu0 0
        %710 = vmatprep.subr.bf16.mxu0 0
        %711 = vmatpush1.bf16.msra.mxu0 0
        %712 = vmatprep.subr.bf16.mxu0 0
        %713 = vmatpush1.bf16.msra.mxu0 0
        %714 = vmatprep.subr.bf16.mxu0 0
        %715 = vmatpush1.bf16.msra.mxu0 0
        %716 = vmatprep.subr.bf16.mxu0 0
        %717 = vmatpush1.bf16.msra.mxu0 0
        %718 = vmatprep.subr.bf16.mxu0 0
        %719 = vmatpush1.bf16.msra.mxu0 0
        %720 = vmatprep.subr.bf16.mxu0 0
        %721 = vmatpush1.bf16.msra.mxu0 0
        %722 = vmatprep.subr.bf16.mxu0 0
        %723 = vmatpush1.bf16.msra.mxu0 0
        %724 = vmatprep.subr.bf16.mxu0 0
        %725 = vmatpush1.bf16.msra.mxu0 0
        %726 = vmatprep.subr.bf16.mxu0 0
        %727 = vmatpush1.bf16.msra.mxu0 0
        %728 = vmatprep.subr.bf16.mxu0 0
        %729 = vmatpush1.bf16.msra.mxu0 0
        %730 = vmatprep.subr.bf16.mxu0 0
        %731 = vmatpush1.bf16.msra.mxu0 0
        %732 = vmatprep.subr.bf16.mxu0 0
        %733 = vmatpush1.bf16.msra.mxu0 0
        %734 = vmatprep.subr.bf16.mxu0 0
        %735 = vmatpush1.bf16.msra.mxu0 0
        %736 = vmatprep.subr.bf16.mxu0 0
        %737 = vmatpush1.bf16.msra.mxu0 0
        %738 = vmatprep.mubr.bf16.mxu0 0
        %739 = vmatmul.mubr.bf16.gmra.mrb[0].mxu0 %v675
        %v740 = vpop.f32.mrb[0].mxu0
        %v741 = vadd.f32 %v565, %v740
        %v742 = vpop.f32.mrb[0].mxu0
        %v743 = vpop.f32.mrb[0].mxu0
        %v744 = vadd.f32 %v568, %v743
        %v745 = vpop.f32.mrb[0].mxu0
        %746 = vmatprep.mubr.bf16.mxu0 0
        %747 = vmatmul.mubr.bf16.gmra.mrb[0].mxu0 %v677
        %v748 = vpop.f32.mrb[0].mxu0
        %v749 = vadd.f32 %v573, %v748
        %v750 = vpop.f32.mrb[0].mxu0
        %v751 = vpop.f32.mrb[0].mxu0
        %v752 = vadd.f32 %v576, %v751
        %v753 = vpop.f32.mrb[0].mxu0
        %754 = vmatprep.mubr.bf16.mxu0 0
        %755 = vmatmul.mubr.bf16.gmra.mrb[0].mxu0 %v679
        %v756 = vpop.f32.mrb[0].mxu0
        %v757 = vadd.f32 %v581, %v756
        %v758 = vpop.f32.mrb[0].mxu0
        %v759 = vpop.f32.mrb[0].mxu0
        %v760 = vadd.f32 %v584, %v759
        %v761 = vpop.f32.mrb[0].mxu0
        %762 = vmatprep.mubr.bf16.mxu0 0
        %763 = vmatmul.mubr.bf16.gmra.mrb[0].mxu0 %v681
        %v764 = vpop.f32.mrb[0].mxu0
        %v765 = vadd.f32 %v589, %v764
        %v766 = vpop.f32.mrb[0].mxu0
        %v767 = vpop.f32.mrb[0].mxu0
        %v768 = vadd.f32 %v592, %v767
        %v769 = vpop.f32.mrb[0].mxu0
        %770 = vmatprep.mubr.bf16.mxu0 0
        %771 = vmatmul.mubr.bf16.gmra.mrb[0].mxu0 %v683
        %v772 = vpop.f32.mrb[0].mxu0
        %v773 = vadd.f32 %v597, %v772
        %v774 = vpop.f32.mrb[0].mxu0
        %v775 = vpop.f32.mrb[0].mxu0
        %v776 = vadd.f32 %v600, %v775
        %v777 = vpop.f32.mrb[0].mxu0
        %778 = vmatprep.mubr.bf16.mxu0 0
        %779 = vmatmul.mubr.bf16.gmra.mrb[0].mxu0 %v685
        %v780 = vpop.f32.mrb[0].mxu0
        %v781 = vadd.f32 %v605, %v780
        %v782 = vpop.f32.mrb[0].mxu0
        %v783 = vpop.f32.mrb[0].mxu0
        %v784 = vadd.f32 %v608, %v783
        %v785 = vpop.f32.mrb[0].mxu0
        %786 = vmatprep.mubr.bf16.mxu0 0
        %787 = vmatmul.mubr.bf16.gmra.mrb[0].mxu0 %v687
        %v788 = vpop.f32.mrb[0].mxu0
        %v789 = vadd.f32 %v613, %v788
        %v790 = vpop.f32.mrb[0].mxu0
        %v791 = vpop.f32.mrb[0].mxu0
        %v792 = vadd.f32 %v616, %v791
        %v793 = vpop.f32.mrb[0].mxu0
        %794 = vmatprep.mubr.bf16.mxu0 0
        %795 = vmatmul.mubr.bf16.gmra.mrb[0].mxu0 %v689
        %v796 = vpop.f32.mrb[0].mxu0
        %v797 = vadd.f32 %v621, %v796
        %v798 = vpop.f32.mrb[0].mxu0
        %v799 = vpop.f32.mrb[0].mxu0
        %v800 = vadd.f32 %v624, %v799
        %v801 = vpop.f32.mrb[0].mxu0
        %802 = vmatprep.mubr.bf16.mxu0 0
        %803 = vmatmul.mubr.bf16.gmra.mrb[0].mxu0 %v691
        %v804 = vpop.f32.mrb[0].mxu0
        %v805 = vadd.f32 %v629, %v804
        %v806 = vpop.f32.mrb[0].mxu0
        %v807 = vpop.f32.mrb[0].mxu0
        %v808 = vadd.f32 %v632, %v807
        %v809 = vpop.f32.mrb[0].mxu0
        %810 = vmatprep.mubr.bf16.mxu0 0
        %811 = vmatmul.mubr.bf16.gmra.mrb[0].mxu0 %v693
        %v812 = vpop.f32.mrb[0].mxu0
        %v813 = vadd.f32 %v637, %v812
        %v814 = vpop.f32.mrb[0].mxu0
        %v815 = vpop.f32.mrb[0].mxu0
        %v816 = vadd.f32 %v640, %v815
        %v817 = vpop.f32.mrb[0].mxu0
        %818 = vmatprep.mubr.bf16.mxu0 0
        %819 = vmatmul.mubr.bf16.gmra.mrb[0].mxu0 %v695
        %v820 = vpop.f32.mrb[0].mxu0
        %v821 = vadd.f32 %v645, %v820
        %v822 = vpop.f32.mrb[0].mxu0
        %v823 = vpop.f32.mrb[0].mxu0
        %v824 = vadd.f32 %v648, %v823
        %v825 = vpop.f32.mrb[0].mxu0
        %826 = vmatprep.mubr.bf16.mxu0 0
        %827 = vmatmul.mubr.bf16.gmra.mrb[0].mxu0 %v697
        %v828 = vpop.f32.mrb[0].mxu0
        %v829 = vadd.f32 %v653, %v828
        %v830 = vpop.f32.mrb[0].mxu0
        %v831 = vpop.f32.mrb[0].mxu0
        %v832 = vadd.f32 %v656, %v831
        %v833 = vpop.f32.mrb[0].mxu0
        %834 = vmatprep.mubr.bf16.mxu0 0
        %835 = vmatmul.mubr.bf16.gmra.mrb[0].mxu0 %v699
        %v836 = vpop.f32.mrb[0].mxu0
        %v837 = vadd.f32 %v661, %v836
        %v838 = vpop.f32.mrb[0].mxu0
        %v839 = vpop.f32.mrb[0].mxu0
        %v840 = vadd.f32 %v664, %v839
        %v841 = vpop.f32.mrb[0].mxu0
        %842 = vmatprep.mubr.bf16.mxu0 0
        %843 = vmatmul.mubr.bf16.gmra.mrb[0].mxu0 %v701
        %v844 = vpop.f32.mrb[0].mxu0
        %v845 = vadd.f32 %v669, %v844
        %v846 = vpop.f32.mrb[0].mxu0
        %v847 = vpop.f32.mrb[0].mxu0
        %v848 = vadd.f32 %v672, %v847
        %v849 = vpop.f32.mrb[0].mxu0
        %850 = vdwg.mxu0
        %s851 = scalar_lea.vmem [#allocation5], 4
        %v852 = vld [vmem:[%s851] sm:$0x3]
        %vm853 = vcmask 1046528
        %v854 = vrot.slane %v351, 1
        %v855 = vrot.slane %v352, 1
        %v856 = vsel %vm853, %v854, %v855
        %v857 = vrot.slane %v353, 1
        %v858 = vsel %vm853, %v855, %v857
        %v859 = vrot.slane %v354, 1
        %v860 = vsel %vm853, %v857, %v859
        %v861 = vrot.slane %v355, 1
        %v862 = vsel %vm853, %v859, %v861
        %v863 = vrot.slane %v356, 1
        %v864 = vsel %vm853, %v861, %v863
        %v865 = vrot.slane %v357, 1
        %v866 = vsel %vm853, %v863, %v865
        %v867 = vrot.slane %v358, 1
        %v868 = vsel %vm853, %v865, %v867
        %v869 = vrot.slane %v359, 1
        %v870 = vsel %vm853, %v867, %v869
        %v871 = vrot.slane %v360, 1
        %v872 = vsel %vm853, %v869, %v871
        %v873 = vrot.slane %v361, 1
        %v874 = vsel %vm853, %v871, %v873
        %v875 = vrot.slane %v362, 1
        %v876 = vsel %vm853, %v873, %v875
        %v877 = vrot.slane %v363, 1
        %v878 = vsel %vm853, %v875, %v877
        %v879 = vrot.slane %v364, 1
        %v880 = vsel %vm853, %v877, %v879
        %v881 = vrot.slane %v365, 1
        %v882 = vsel %vm853, %v879, %v881
        %v884 = vsel %vm483, %v856, 0
        %v887 = vsel %vm483, %v858, 0
        %v890 = vsel %vm483, %v860, 0
        %v893 = vsel %vm483, %v862, 0
        %v896 = vsel %vm483, %v864, 0
        %v899 = vsel %vm483, %v866, 0
        %v902 = vsel %vm483, %v868, 0
        %v905 = vsel %vm483, %v870, 0
        %v908 = vsel %vm483, %v872, 0
        %v911 = vsel %vm483, %v874, 0
        %v914 = vsel %vm483, %v876, 0
        %v917 = vsel %vm483, %v878, 0
        %v920 = vsel %vm483, %v880, 0
        %v923 = vsel %vm483, %v882, 0
        %v926 = vsel %vm526, %v852, 0
        %928 = vmatprep.subr.bf16.mxu0 0
        %929 = vmatpush1.bf16.msra.mxu0 %v926
        %930 = vmatprep.subr.bf16.mxu0 0
        %931 = vmatpush1.bf16.msra.mxu0 0
        %932 = vmatprep.subr.bf16.mxu0 0
        %933 = vmatpush1.bf16.msra.mxu0 0
        %934 = vmatprep.subr.bf16.mxu0 0
        %935 = vmatpush1.bf16.msra.mxu0 0
        %936 = vmatprep.subr.bf16.mxu0 0
        %937 = vmatpush1.bf16.msra.mxu0 0
        %938 = vmatprep.subr.bf16.mxu0 0
        %939 = vmatpush1.bf16.msra.mxu0 0
        %940 = vmatprep.subr.bf16.mxu0 0
        %941 = vmatpush1.bf16.msra.mxu0 0
        %942 = vmatprep.subr.bf16.mxu0 0
        %943 = vmatpush1.bf16.msra.mxu0 0
        %944 = vmatprep.subr.bf16.mxu0 0
        %945 = vmatpush1.bf16.msra.mxu0 0
        %946 = vmatprep.subr.bf16.mxu0 0
        %947 = vmatpush1.bf16.msra.mxu0 0
        %948 = vmatprep.subr.bf16.mxu0 0
        %949 = vmatpush1.bf16.msra.mxu0 0
        %950 = vmatprep.subr.bf16.mxu0 0
        %951 = vmatpush1.bf16.msra.mxu0 0
        %952 = vmatprep.subr.bf16.mxu0 0
        %953 = vmatpush1.bf16.msra.mxu0 0
        %954 = vmatprep.subr.bf16.mxu0 0
        %955 = vmatpush1.bf16.msra.mxu0 0
        %956 = vmatprep.subr.bf16.mxu0 0
        %957 = vmatpush1.bf16.msra.mxu0 0
        %958 = vmatprep.subr.bf16.mxu0 0
        %959 = vmatpush1.bf16.msra.mxu0 0
        %960 = vmatprep.mubr.bf16.mxu0 0
        %961 = vmatmul.mubr.bf16.gmra.mrb[0].mxu0 %v884
        %v962 = vpop.f32.mrb[0].mxu0
        %v963 = vadd.f32 0.0, %v962
        %v964 = vpop.f32.mrb[0].mxu0
        %v965 = vpop.f32.mrb[0].mxu0
        %v966 = vadd.f32 0.0, %v965
        %v967 = vpop.f32.mrb[0].mxu0
        %968 = vmatprep.mubr.bf16.mxu0 0
        %969 = vmatmul.mubr.bf16.gmra.mrb[0].mxu0 %v887
        %v970 = vpop.f32.mrb[0].mxu0
        %v971 = vadd.f32 0.0, %v970
        %v972 = vpop.f32.mrb[0].mxu0
        %v973 = vpop.f32.mrb[0].mxu0
        %v974 = vadd.f32 0.0, %v973
        %v975 = vpop.f32.mrb[0].mxu0
        %976 = vmatprep.mubr.bf16.mxu0 0
        %977 = vmatmul.mubr.bf16.gmra.mrb[0].mxu0 %v890
        %v978 = vpop.f32.mrb[0].mxu0
        %v979 = vadd.f32 0.0, %v978
        %v980 = vpop.f32.mrb[0].mxu0
        %v981 = vpop.f32.mrb[0].mxu0
        %v982 = vadd.f32 0.0, %v981
        %v983 = vpop.f32.mrb[0].mxu0
        %984 = vmatprep.mubr.bf16.mxu0 0
        %985 = vmatmul.mubr.bf16.gmra.mrb[0].mxu0 %v893
        %v986 = vpop.f32.mrb[0].mxu0
        %v987 = vadd.f32 0.0, %v986
        %v988 = vpop.f32.mrb[0].mxu0
        %v989 = vpop.f32.mrb[0].mxu0
        %v990 = vadd.f32 0.0, %v989
        %v991 = vpop.f32.mrb[0].mxu0
        %992 = vmatprep.mubr.bf16.mxu0 0
        %993 = vmatmul.mubr.bf16.gmra.mrb[0].mxu0 %v896
        %v994 = vpop.f32.mrb[0].mxu0
        %v995 = vadd.f32 0.0, %v994
        %v996 = vpop.f32.mrb[0].mxu0
        %v997 = vpop.f32.mrb[0].mxu0
        %v998 = vadd.f32 0.0, %v997
        %v999 = vpop.f32.mrb[0].mxu0
        %1000 = vmatprep.mubr.bf16.mxu0 0
        %1001 = vmatmul.mubr.bf16.gmra.mrb[0].mxu0 %v899
        %v1002 = vpop.f32.mrb[0].mxu0
        %v1003 = vadd.f32 0.0, %v1002
        %v1004 = vpop.f32.mrb[0].mxu0
        %v1005 = vpop.f32.mrb[0].mxu0
        %v1006 = vadd.f32 0.0, %v1005
        %v1007 = vpop.f32.mrb[0].mxu0
        %1008 = vmatprep.mubr.bf16.mxu0 0
        %1009 = vmatmul.mubr.bf16.gmra.mrb[0].mxu0 %v902
        %v1010 = vpop.f32.mrb[0].mxu0
        %v1011 = vadd.f32 0.0, %v1010
        %v1012 = vpop.f32.mrb[0].mxu0
        %v1013 = vpop.f32.mrb[0].mxu0
        %v1014 = vadd.f32 0.0, %v1013
        %v1015 = vpop.f32.mrb[0].mxu0
        %1016 = vmatprep.mubr.bf16.mxu0 0
        %1017 = vmatmul.mubr.bf16.gmra.mrb[0].mxu0 %v905
        %v1018 = vpop.f32.mrb[0].mxu0
        %v1019 = vadd.f32 0.0, %v1018
        %v1020 = vpop.f32.mrb[0].mxu0
        %v1021 = vpop.f32.mrb[0].mxu0
        %v1022 = vadd.f32 0.0, %v1021
        %v1023 = vpop.f32.mrb[0].mxu0
        %1024 = vmatprep.mubr.bf16.mxu0 0
        %1025 = vmatmul.mubr.bf16.gmra.mrb[0].mxu0 %v908
        %v1026 = vpop.f32.mrb[0].mxu0
        %v1027 = vadd.f32 0.0, %v1026
        %v1028 = vpop.f32.mrb[0].mxu0
        %v1029 = vpop.f32.mrb[0].mxu0
        %v1030 = vadd.f32 0.0, %v1029
        %v1031 = vpop.f32.mrb[0].mxu0
        %1032 = vmatprep.mubr.bf16.mxu0 0
        %1033 = vmatmul.mubr.bf16.gmra.mrb[0].mxu0 %v911
        %v1034 = vpop.f32.mrb[0].mxu0
        %v1035 = vadd.f32 0.0, %v1034
        %v1036 = vpop.f32.mrb[0].mxu0
        %v1037 = vpop.f32.mrb[0].mxu0
        %v1038 = vadd.f32 0.0, %v1037
        %v1039 = vpop.f32.mrb[0].mxu0
        %1040 = vmatprep.mubr.bf16.mxu0 0
        %1041 = vmatmul.mubr.bf16.gmra.mrb[0].mxu0 %v914
        %v1042 = vpop.f32.mrb[0].mxu0
        %v1043 = vadd.f32 0.0, %v1042
        %v1044 = vpop.f32.mrb[0].mxu0
        %v1045 = vpop.f32.mrb[0].mxu0
        %v1046 = vadd.f32 0.0, %v1045
        %v1047 = vpop.f32.mrb[0].mxu0
        %1048 = vmatprep.mubr.bf16.mxu0 0
        %1049 = vmatmul.mubr.bf16.gmra.mrb[0].mxu0 %v917
        %v1050 = vpop.f32.mrb[0].mxu0
        %v1051 = vadd.f32 0.0, %v1050
        %v1052 = vpop.f32.mrb[0].mxu0
        %v1053 = vpop.f32.mrb[0].mxu0
        %v1054 = vadd.f32 0.0, %v1053
        %v1055 = vpop.f32.mrb[0].mxu0
        %1056 = vmatprep.mubr.bf16.mxu0 0
        %1057 = vmatmul.mubr.bf16.gmra.mrb[0].mxu0 %v920
        %v1058 = vpop.f32.mrb[0].mxu0
        %v1059 = vadd.f32 0.0, %v1058
        %v1060 = vpop.f32.mrb[0].mxu0
        %v1061 = vpop.f32.mrb[0].mxu0
        %v1062 = vadd.f32 0.0, %v1061
        %v1063 = vpop.f32.mrb[0].mxu0
        %1064 = vmatprep.mubr.bf16.mxu0 0
        %1065 = vmatmul.mubr.bf16.gmra.mrb[0].mxu0 %v923
        %v1066 = vpop.f32.mrb[0].mxu0
        %v1067 = vadd.f32 0.0, %v1066
        %v1068 = vpop.f32.mrb[0].mxu0
        %v1069 = vpop.f32.mrb[0].mxu0
        %v1070 = vadd.f32 0.0, %v1069
        %v1071 = vpop.f32.mrb[0].mxu0
        %1072 = vdwg.mxu0
        %v1073 = vadd.f32 %v741, %v963
        %v1074 = vadd.f32 %v744, %v966
        %v1075 = vadd.f32 %v749, %v971
        %v1076 = vadd.f32 %v752, %v974
        %v1077 = vadd.f32 %v757, %v979
        %v1078 = vadd.f32 %v760, %v982
        %v1079 = vadd.f32 %v765, %v987
        %v1080 = vadd.f32 %v768, %v990
        %v1081 = vadd.f32 %v773, %v995
        %v1082 = vadd.f32 %v776, %v998
        %v1083 = vadd.f32 %v781, %v1003
        %v1084 = vadd.f32 %v784, %v1006
        %v1085 = vadd.f32 %v789, %v1011
        %v1086 = vadd.f32 %v792, %v1014
        %v1087 = vadd.f32 %v797, %v1019
        %v1088 = vadd.f32 %v800, %v1022
        %v1089 = vadd.f32 %v805, %v1027
        %v1090 = vadd.f32 %v808, %v1030
        %v1091 = vadd.f32 %v813, %v1035
        %v1092 = vadd.f32 %v816, %v1038
        %v1093 = vadd.f32 %v821, %v1043
        %v1094 = vadd.f32 %v824, %v1046
        %v1095 = vadd.f32 %v829, %v1051
        %v1096 = vadd.f32 %v832, %v1054
        %v1097 = vadd.f32 %v837, %v1059
        %v1098 = vadd.f32 %v840, %v1062
        %v1099 = vadd.f32 %v845, %v1067
        %v1100 = vadd.f32 %v848, %v1070
        %s1101 = scalar_lea.vmem [#allocation5], 6
        %v1102 = vld [vmem:[%s1101] sm:$0x3]
        %v1104 = vunpack.c.l.b16 %v286
        %v1105 = vpack.c.b16 %v1104, %v350
        %v1107 = vsel %vm483, %v1105, 0
        %v1110 = vsel %vm526, %v1102, 0
        %1112 = vmatprep.subr.bf16.mxu0 0
        %1113 = vmatpush1.bf16.msra.mxu0 %v1110
        %1114 = vmatprep.subr.bf16.mxu0 0
        %1115 = vmatpush1.bf16.msra.mxu0 0
        %1116 = vmatprep.subr.bf16.mxu0 0
        %1117 = vmatpush1.bf16.msra.mxu0 0
        %1118 = vmatprep.subr.bf16.mxu0 0
        %1119 = vmatpush1.bf16.msra.mxu0 0
        %1120 = vmatprep.subr.bf16.mxu0 0
        %1121 = vmatpush1.bf16.msra.mxu0 0
        %1122 = vmatprep.subr.bf16.mxu0 0
        %1123 = vmatpush1.bf16.msra.mxu0 0
        %1124 = vmatprep.subr.bf16.mxu0 0
        %1125 = vmatpush1.bf16.msra.mxu0 0
        %1126 = vmatprep.subr.bf16.mxu0 0
        %1127 = vmatpush1.bf16.msra.mxu0 0
        %1128 = vmatprep.subr.bf16.mxu0 0
        %1129 = vmatpush1.bf16.msra.mxu0 0
        %1130 = vmatprep.subr.bf16.mxu0 0
        %1131 = vmatpush1.bf16.msra.mxu0 0
        %1132 = vmatprep.subr.bf16.mxu0 0
        %1133 = vmatpush1.bf16.msra.mxu0 0
        %1134 = vmatprep.subr.bf16.mxu0 0
        %1135 = vmatpush1.bf16.msra.mxu0 0
        %1136 = vmatprep.subr.bf16.mxu0 0
        %1137 = vmatpush1.bf16.msra.mxu0 0
        %1138 = vmatprep.subr.bf16.mxu0 0
        %1139 = vmatpush1.bf16.msra.mxu0 0
        %1140 = vmatprep.subr.bf16.mxu0 0
        %1141 = vmatpush1.bf16.msra.mxu0 0
        %1142 = vmatprep.subr.bf16.mxu0 0
        %1143 = vmatpush1.bf16.msra.mxu0 0
        %1144 = vmatprep.mubr.bf16.mxu0 0
        %1145 = vmatmul.mubr.bf16.gmra.mrb[0].mxu0 %v677
        %v1146 = vpop.f32.mrb[0].mxu0
        %v1147 = vadd.f32 0.0, %v1146
        %v1148 = vpop.f32.mrb[0].mxu0
        %v1149 = vpop.f32.mrb[0].mxu0
        %v1150 = vadd.f32 0.0, %v1149
        %v1151 = vpop.f32.mrb[0].mxu0
        %1152 = vmatprep.mubr.bf16.mxu0 0
        %1153 = vmatmul.mubr.bf16.gmra.mrb[0].mxu0 %v679
        %v1154 = vpop.f32.mrb[0].mxu0
        %v1155 = vadd.f32 0.0, %v1154
        %v1156 = vpop.f32.mrb[0].mxu0
        %v1157 = vpop.f32.mrb[0].mxu0
        %v1158 = vadd.f32 0.0, %v1157
        %v1159 = vpop.f32.mrb[0].mxu0
        %1160 = vmatprep.mubr.bf16.mxu0 0
        %1161 = vmatmul.mubr.bf16.gmra.mrb[0].mxu0 %v681
        %v1162 = vpop.f32.mrb[0].mxu0
        %v1163 = vadd.f32 0.0, %v1162
        %v1164 = vpop.f32.mrb[0].mxu0
        %v1165 = vpop.f32.mrb[0].mxu0
        %v1166 = vadd.f32 0.0, %v1165
        %v1167 = vpop.f32.mrb[0].mxu0
        %1168 = vmatprep.mubr.bf16.mxu0 0
        %1169 = vmatmul.mubr.bf16.gmra.mrb[0].mxu0 %v683
        %v1170 = vpop.f32.mrb[0].mxu0
        %v1171 = vadd.f32 0.0, %v1170
        %v1172 = vpop.f32.mrb[0].mxu0
        %v1173 = vpop.f32.mrb[0].mxu0
        %v1174 = vadd.f32 0.0, %v1173
        %v1175 = vpop.f32.mrb[0].mxu0
        %1176 = vmatprep.mubr.bf16.mxu0 0
        %1177 = vmatmul.mubr.bf16.gmra.mrb[0].mxu0 %v685
        %v1178 = vpop.f32.mrb[0].mxu0
        %v1179 = vadd.f32 0.0, %v1178
        %v1180 = vpop.f32.mrb[0].mxu0
        %v1181 = vpop.f32.mrb[0].mxu0
        %v1182 = vadd.f32 0.0, %v1181
        %v1183 = vpop.f32.mrb[0].mxu0
        %1184 = vmatprep.mubr.bf16.mxu0 0
        %1185 = vmatmul.mubr.bf16.gmra.mrb[0].mxu0 %v687
        %v1186 = vpop.f32.mrb[0].mxu0
        %v1187 = vadd.f32 0.0, %v1186
        %v1188 = vpop.f32.mrb[0].mxu0
        %v1189 = vpop.f32.mrb[0].mxu0
        %v1190 = vadd.f32 0.0, %v1189
        %v1191 = vpop.f32.mrb[0].mxu0
        %1192 = vmatprep.mubr.bf16.mxu0 0
        %1193 = vmatmul.mubr.bf16.gmra.mrb[0].mxu0 %v689
        %v1194 = vpop.f32.mrb[0].mxu0
        %v1195 = vadd.f32 0.0, %v1194
        %v1196 = vpop.f32.mrb[0].mxu0
        %v1197 = vpop.f32.mrb[0].mxu0
        %v1198 = vadd.f32 0.0, %v1197
        %v1199 = vpop.f32.mrb[0].mxu0
        %1200 = vmatprep.mubr.bf16.mxu0 0
        %1201 = vmatmul.mubr.bf16.gmra.mrb[0].mxu0 %v691
        %v1202 = vpop.f32.mrb[0].mxu0
        %v1203 = vadd.f32 0.0, %v1202
        %v1204 = vpop.f32.mrb[0].mxu0
        %v1205 = vpop.f32.mrb[0].mxu0
        %v1206 = vadd.f32 0.0, %v1205
        %v1207 = vpop.f32.mrb[0].mxu0
        %1208 = vmatprep.mubr.bf16.mxu0 0
        %1209 = vmatmul.mubr.bf16.gmra.mrb[0].mxu0 %v693
        %v1210 = vpop.f32.mrb[0].mxu0
        %v1211 = vadd.f32 0.0, %v1210
        %v1212 = vpop.f32.mrb[0].mxu0
        %v1213 = vpop.f32.mrb[0].mxu0
        %v1214 = vadd.f32 0.0, %v1213
        %v1215 = vpop.f32.mrb[0].mxu0
        %1216 = vmatprep.mubr.bf16.mxu0 0
        %1217 = vmatmul.mubr.bf16.gmra.mrb[0].mxu0 %v695
        %v1218 = vpop.f32.mrb[0].mxu0
        %v1219 = vadd.f32 0.0, %v1218
        %v1220 = vpop.f32.mrb[0].mxu0
        %v1221 = vpop.f32.mrb[0].mxu0
        %v1222 = vadd.f32 0.0, %v1221
        %v1223 = vpop.f32.mrb[0].mxu0
        %1224 = vmatprep.mubr.bf16.mxu0 0
        %1225 = vmatmul.mubr.bf16.gmra.mrb[0].mxu0 %v697
        %v1226 = vpop.f32.mrb[0].mxu0
        %v1227 = vadd.f32 0.0, %v1226
        %v1228 = vpop.f32.mrb[0].mxu0
        %v1229 = vpop.f32.mrb[0].mxu0
        %v1230 = vadd.f32 0.0, %v1229
        %v1231 = vpop.f32.mrb[0].mxu0
        %1232 = vmatprep.mubr.bf16.mxu0 0
        %1233 = vmatmul.mubr.bf16.gmra.mrb[0].mxu0 %v699
        %v1234 = vpop.f32.mrb[0].mxu0
        %v1235 = vadd.f32 0.0, %v1234
        %v1236 = vpop.f32.mrb[0].mxu0
        %v1237 = vpop.f32.mrb[0].mxu0
        %v1238 = vadd.f32 0.0, %v1237
        %v1239 = vpop.f32.mrb[0].mxu0
        %1240 = vmatprep.mubr.bf16.mxu0 0
        %1241 = vmatmul.mubr.bf16.gmra.mrb[0].mxu0 %v701
        %v1242 = vpop.f32.mrb[0].mxu0
        %v1243 = vadd.f32 0.0, %v1242
        %v1244 = vpop.f32.mrb[0].mxu0
        %v1245 = vpop.f32.mrb[0].mxu0
        %v1246 = vadd.f32 0.0, %v1245
        %v1247 = vpop.f32.mrb[0].mxu0
        %1248 = vmatprep.mubr.bf16.mxu0 0
        %1249 = vmatmul.mubr.bf16.gmra.mrb[0].mxu0 %v1107
        %v1250 = vpop.f32.mrb[0].mxu0
        %v1251 = vadd.f32 0.0, %v1250
        %v1252 = vpop.f32.mrb[0].mxu0
        %v1253 = vpop.f32.mrb[0].mxu0
        %v1254 = vadd.f32 0.0, %v1253
        %v1255 = vpop.f32.mrb[0].mxu0
        %1256 = vdwg.mxu0
        %v1257 = vadd.f32 %v1073, %v1147
        %v1258 = vadd.f32 %v1074, %v1150
        %v1259 = vadd.f32 %v1075, %v1155
        %v1260 = vadd.f32 %v1076, %v1158
        %v1261 = vadd.f32 %v1077, %v1163
        %v1262 = vadd.f32 %v1078, %v1166
        %v1263 = vadd.f32 %v1079, %v1171
        %v1264 = vadd.f32 %v1080, %v1174
        %v1265 = vadd.f32 %v1081, %v1179
        %v1266 = vadd.f32 %v1082, %v1182
        %v1267 = vadd.f32 %v1083, %v1187
        %v1268 = vadd.f32 %v1084, %v1190
        %v1269 = vadd.f32 %v1085, %v1195
        %v1270 = vadd.f32 %v1086, %v1198
        %v1271 = vadd.f32 %v1087, %v1203
        %v1272 = vadd.f32 %v1088, %v1206
        %v1273 = vadd.f32 %v1089, %v1211
        %v1274 = vadd.f32 %v1090, %v1214
        %v1275 = vadd.f32 %v1091, %v1219
        %v1276 = vadd.f32 %v1092, %v1222
        %v1277 = vadd.f32 %v1093, %v1227
        %v1278 = vadd.f32 %v1094, %v1230
        %v1279 = vadd.f32 %v1095, %v1235
        %v1280 = vadd.f32 %v1096, %v1238
        %v1281 = vadd.f32 %v1097, %v1243
        %v1282 = vadd.f32 %v1098, %v1246
        %v1283 = vadd.f32 %v1099, %v1251
        %v1284 = vadd.f32 %v1100, %v1254
        %s1285 = scalar_lea.vmem [#allocation5], 8
        %v1286 = vld [vmem:[%s1285] sm:$0x3]
        %v1288 = vunpack.c.l.b16 %v287
        %v1289 = vpack.c.b16 %v1288, %v1288
        %v1290 = vshll.u32 %v1105, 16
        %v1292 = vrot.slane %v1290, 1
        %v1293 = vsel %vm366, %v477, %v1292
        %v1294 = vshrl.u32 %v1105, 16
        %v1296 = vor.u32 %v1294, %v1292
        %v1298 = vshll.u32 %v1289, 16
        %v1300 = vrot.slane %v1298, 1
        %v1301 = vsel %vm366, %v1296, %v1300
        %v1303 = vsel %vm483, %v1293, 0
        %v1306 = vsel %vm483, %v1301, 0
        %v1309 = vsel %vm526, %v1286, 0
        %1311 = vmatprep.subr.bf16.mxu0 0
        %1312 = vmatpush1.bf16.msra.mxu0 %v1309
        %1313 = vmatprep.subr.bf16.mxu0 0
        %1314 = vmatpush1.bf16.msra.mxu0 0
        %1315 = vmatprep.subr.bf16.mxu0 0
        %1316 = vmatpush1.bf16.msra.mxu0 0
        %1317 = vmatprep.subr.bf16.mxu0 0
        %1318 = vmatpush1.bf16.msra.mxu0 0
        %1319 = vmatprep.subr.bf16.mxu0 0
        %1320 = vmatpush1.bf16.msra.mxu0 0
        %1321 = vmatprep.subr.bf16.mxu0 0
        %1322 = vmatpush1.bf16.msra.mxu0 0
        %1323 = vmatprep.subr.bf16.mxu0 0
        %1324 = vmatpush1.bf16.msra.mxu0 0
        %1325 = vmatprep.subr.bf16.mxu0 0
        %1326 = vmatpush1.bf16.msra.mxu0 0
        %1327 = vmatprep.subr.bf16.mxu0 0
        %1328 = vmatpush1.bf16.msra.mxu0 0
        %1329 = vmatprep.subr.bf16.mxu0 0
        %1330 = vmatpush1.bf16.msra.mxu0 0
        %1331 = vmatprep.subr.bf16.mxu0 0
        %1332 = vmatpush1.bf16.msra.mxu0 0
        %1333 = vmatprep.subr.bf16.mxu0 0
        %1334 = vmatpush1.bf16.msra.mxu0 0
        %1335 = vmatprep.subr.bf16.mxu0 0
        %1336 = vmatpush1.bf16.msra.mxu0 0
        %1337 = vmatprep.subr.bf16.mxu0 0
        %1338 = vmatpush1.bf16.msra.mxu0 0
        %1339 = vmatprep.subr.bf16.mxu0 0
        %1340 = vmatpush1.bf16.msra.mxu0 0
        %1341 = vmatprep.subr.bf16.mxu0 0
        %1342 = vmatpush1.bf16.msra.mxu0 0
        %1343 = vmatprep.mubr.bf16.mxu0 0
        %1344 = vmatmul.mubr.bf16.gmra.mrb[0].mxu0 %v488
        %v1345 = vpop.f32.mrb[0].mxu0
        %v1346 = vadd.f32 0.0, %v1345
        %v1347 = vpop.f32.mrb[0].mxu0
        %v1348 = vpop.f32.mrb[0].mxu0
        %v1349 = vadd.f32 0.0, %v1348
        %v1350 = vpop.f32.mrb[0].mxu0
        %1351 = vmatprep.mubr.bf16.mxu0 0
        %1352 = vmatmul.mubr.bf16.gmra.mrb[0].mxu0 %v491
        %v1353 = vpop.f32.mrb[0].mxu0
        %v1354 = vadd.f32 0.0, %v1353
        %v1355 = vpop.f32.mrb[0].mxu0
        %v1356 = vpop.f32.mrb[0].mxu0
        %v1357 = vadd.f32 0.0, %v1356
        %v1358 = vpop.f32.mrb[0].mxu0
        %1359 = vmatprep.mubr.bf16.mxu0 0
        %1360 = vmatmul.mubr.bf16.gmra.mrb[0].mxu0 %v494
        %v1361 = vpop.f32.mrb[0].mxu0
        %v1362 = vadd.f32 0.0, %v1361
        %v1363 = vpop.f32.mrb[0].mxu0
        %v1364 = vpop.f32.mrb[0].mxu0
        %v1365 = vadd.f32 0.0, %v1364
        %v1366 = vpop.f32.mrb[0].mxu0
        %1367 = vmatprep.mubr.bf16.mxu0 0
        %1368 = vmatmul.mubr.bf16.gmra.mrb[0].mxu0 %v497
        %v1369 = vpop.f32.mrb[0].mxu0
        %v1370 = vadd.f32 0.0, %v1369
        %v1371 = vpop.f32.mrb[0].mxu0
        %v1372 = vpop.f32.mrb[0].mxu0
        %v1373 = vadd.f32 0.0, %v1372
        %v1374 = vpop.f32.mrb[0].mxu0
        %1375 = vmatprep.mubr.bf16.mxu0 0
        %1376 = vmatmul.mubr.bf16.gmra.mrb[0].mxu0 %v500
        %v1377 = vpop.f32.mrb[0].mxu0
        %v1378 = vadd.f32 0.0, %v1377
        %v1379 = vpop.f32.mrb[0].mxu0
        %v1380 = vpop.f32.mrb[0].mxu0
        %v1381 = vadd.f32 0.0, %v1380
        %v1382 = vpop.f32.mrb[0].mxu0
        %1383 = vmatprep.mubr.bf16.mxu0 0
        %1384 = vmatmul.mubr.bf16.gmra.mrb[0].mxu0 %v503
        %v1385 = vpop.f32.mrb[0].mxu0
        %v1386 = vadd.f32 0.0, %v1385
        %v1387 = vpop.f32.mrb[0].mxu0
        %v1388 = vpop.f32.mrb[0].mxu0
        %v1389 = vadd.f32 0.0, %v1388
        %v1390 = vpop.f32.mrb[0].mxu0
        %1391 = vmatprep.mubr.bf16.mxu0 0
        %1392 = vmatmul.mubr.bf16.gmra.mrb[0].mxu0 %v506
        %v1393 = vpop.f32.mrb[0].mxu0
        %v1394 = vadd.f32 0.0, %v1393
        %v1395 = vpop.f32.mrb[0].mxu0
        %v1396 = vpop.f32.mrb[0].mxu0
        %v1397 = vadd.f32 0.0, %v1396
        %v1398 = vpop.f32.mrb[0].mxu0
        %1399 = vmatprep.mubr.bf16.mxu0 0
        %1400 = vmatmul.mubr.bf16.gmra.mrb[0].mxu0 %v509
        %v1401 = vpop.f32.mrb[0].mxu0
        %v1402 = vadd.f32 0.0, %v1401
        %v1403 = vpop.f32.mrb[0].mxu0
        %v1404 = vpop.f32.mrb[0].mxu0
        %v1405 = vadd.f32 0.0, %v1404
        %v1406 = vpop.f32.mrb[0].mxu0
        %1407 = vmatprep.mubr.bf16.mxu0 0
        %1408 = vmatmul.mubr.bf16.gmra.mrb[0].mxu0 %v512
        %v1409 = vpop.f32.mrb[0].mxu0
        %v1410 = vadd.f32 0.0, %v1409
        %v1411 = vpop.f32.mrb[0].mxu0
        %v1412 = vpop.f32.mrb[0].mxu0
        %v1413 = vadd.f32 0.0, %v1412
        %v1414 = vpop.f32.mrb[0].mxu0
        %1415 = vmatprep.mubr.bf16.mxu0 0
        %1416 = vmatmul.mubr.bf16.gmra.mrb[0].mxu0 %v515
        %v1417 = vpop.f32.mrb[0].mxu0
        %v1418 = vadd.f32 0.0, %v1417
        %v1419 = vpop.f32.mrb[0].mxu0
        %v1420 = vpop.f32.mrb[0].mxu0
        %v1421 = vadd.f32 0.0, %v1420
        %v1422 = vpop.f32.mrb[0].mxu0
        %1423 = vmatprep.mubr.bf16.mxu0 0
        %1424 = vmatmul.mubr.bf16.gmra.mrb[0].mxu0 %v518
        %v1425 = vpop.f32.mrb[0].mxu0
        %v1426 = vadd.f32 0.0, %v1425
        %v1427 = vpop.f32.mrb[0].mxu0
        %v1428 = vpop.f32.mrb[0].mxu0
        %v1429 = vadd.f32 0.0, %v1428
        %v1430 = vpop.f32.mrb[0].mxu0
        %1431 = vmatprep.mubr.bf16.mxu0 0
        %1432 = vmatmul.mubr.bf16.gmra.mrb[0].mxu0 %v521
        %v1433 = vpop.f32.mrb[0].mxu0
        %v1434 = vadd.f32 0.0, %v1433
        %v1435 = vpop.f32.mrb[0].mxu0
        %v1436 = vpop.f32.mrb[0].mxu0
        %v1437 = vadd.f32 0.0, %v1436
        %v1438 = vpop.f32.mrb[0].mxu0
        %1439 = vmatprep.mubr.bf16.mxu0 0
        %1440 = vmatmul.mubr.bf16.gmra.mrb[0].mxu0 %v1303
        %v1441 = vpop.f32.mrb[0].mxu0
        %v1442 = vadd.f32 0.0, %v1441
        %v1443 = vpop.f32.mrb[0].mxu0
        %v1444 = vpop.f32.mrb[0].mxu0
        %v1445 = vadd.f32 0.0, %v1444
        %v1446 = vpop.f32.mrb[0].mxu0
        %1447 = vmatprep.mubr.bf16.mxu0 0
        %1448 = vmatmul.mubr.bf16.gmra.mrb[0].mxu0 %v1306
        %v1449 = vpop.f32.mrb[0].mxu0
        %v1450 = vadd.f32 0.0, %v1449
        %v1451 = vpop.f32.mrb[0].mxu0
        %v1452 = vpop.f32.mrb[0].mxu0
        %v1453 = vadd.f32 0.0, %v1452
        %v1454 = vpop.f32.mrb[0].mxu0
        %1455 = vdwg.mxu0
        %v1456 = vadd.f32 %v1257, %v1346
        %v1457 = vadd.f32 %v1258, %v1349
        %v1458 = vadd.f32 %v1259, %v1354
        %v1459 = vadd.f32 %v1260, %v1357
        %v1460 = vadd.f32 %v1261, %v1362
        %v1461 = vadd.f32 %v1262, %v1365
        %v1462 = vadd.f32 %v1263, %v1370
        %v1463 = vadd.f32 %v1264, %v1373
        %v1464 = vadd.f32 %v1265, %v1378
        %v1465 = vadd.f32 %v1266, %v1381
        %v1466 = vadd.f32 %v1267, %v1386
        %v1467 = vadd.f32 %v1268, %v1389
        %v1468 = vadd.f32 %v1269, %v1394
        %v1469 = vadd.f32 %v1270, %v1397
        %v1470 = vadd.f32 %v1271, %v1402
        %v1471 = vadd.f32 %v1272, %v1405
        %v1472 = vadd.f32 %v1273, %v1410
        %v1473 = vadd.f32 %v1274, %v1413
        %v1474 = vadd.f32 %v1275, %v1418
        %v1475 = vadd.f32 %v1276, %v1421
        %v1476 = vadd.f32 %v1277, %v1426
        %v1477 = vadd.f32 %v1278, %v1429
        %v1478 = vadd.f32 %v1279, %v1434
        %v1479 = vadd.f32 %v1280, %v1437
        %v1480 = vadd.f32 %v1281, %v1442
        %v1481 = vadd.f32 %v1282, %v1445
        %v1482 = vadd.f32 %v1283, %v1450
        %v1483 = vadd.f32 %v1284, %v1453
        %s1484 = scalar_lea.vmem [#allocation5], 10
        %v1485 = vld [vmem:[%s1484] sm:$0x3]
        %v1486 = vrot.slane %v1105, 1
        %v1487 = vsel %vm853, %v879, %v1486
        %v1488 = vrot.slane %v1289, 1
        %v1489 = vsel %vm853, %v1486, %v1488
        %v1491 = vsel %vm483, %v1487, 0
        %v1494 = vsel %vm483, %v1489, 0
        %v1497 = vsel %vm526, %v1485, 0
        %1499 = vmatprep.subr.bf16.mxu0 0
        %1500 = vmatpush1.bf16.msra.mxu0 %v1497
        %1501 = vmatprep.subr.bf16.mxu0 0
        %1502 = vmatpush1.bf16.msra.mxu0 0
        %1503 = vmatprep.subr.bf16.mxu0 0
        %1504 = vmatpush1.bf16.msra.mxu0 0
        %1505 = vmatprep.subr.bf16.mxu0 0
        %1506 = vmatpush1.bf16.msra.mxu0 0
        %1507 = vmatprep.subr.bf16.mxu0 0
        %1508 = vmatpush1.bf16.msra.mxu0 0
        %1509 = vmatprep.subr.bf16.mxu0 0
        %1510 = vmatpush1.bf16.msra.mxu0 0
        %1511 = vmatprep.subr.bf16.mxu0 0
        %1512 = vmatpush1.bf16.msra.mxu0 0
        %1513 = vmatprep.subr.bf16.mxu0 0
        %1514 = vmatpush1.bf16.msra.mxu0 0
        %1515 = vmatprep.subr.bf16.mxu0 0
        %1516 = vmatpush1.bf16.msra.mxu0 0
        %1517 = vmatprep.subr.bf16.mxu0 0
        %1518 = vmatpush1.bf16.msra.mxu0 0
        %1519 = vmatprep.subr.bf16.mxu0 0
        %1520 = vmatpush1.bf16.msra.mxu0 0
        %1521 = vmatprep.subr.bf16.mxu0 0
        %1522 = vmatpush1.bf16.msra.mxu0 0
        %1523 = vmatprep.subr.bf16.mxu0 0
        %1524 = vmatpush1.bf16.msra.mxu0 0
        %1525 = vmatprep.subr.bf16.mxu0 0
        %1526 = vmatpush1.bf16.msra.mxu0 0
        %1527 = vmatprep.subr.bf16.mxu0 0
        %1528 = vmatpush1.bf16.msra.mxu0 0
        %1529 = vmatprep.subr.bf16.mxu0 0
        %1530 = vmatpush1.bf16.msra.mxu0 0
        %1531 = vmatprep.mubr.bf16.mxu0 0
        %1532 = vmatmul.mubr.bf16.gmra.mrb[0].mxu0 %v887
        %v1533 = vpop.f32.mrb[0].mxu0
        %v1534 = vadd.f32 0.0, %v1533
        %v1535 = vpop.f32.mrb[0].mxu0
        %v1536 = vpop.f32.mrb[0].mxu0
        %v1537 = vadd.f32 0.0, %v1536
        %v1538 = vpop.f32.mrb[0].mxu0
        %1539 = vmatprep.mubr.bf16.mxu0 0
        %1540 = vmatmul.mubr.bf16.gmra.mrb[0].mxu0 %v890
        %v1541 = vpop.f32.mrb[0].mxu0
        %v1542 = vadd.f32 0.0, %v1541
        %v1543 = vpop.f32.mrb[0].mxu0
        %v1544 = vpop.f32.mrb[0].mxu0
        %v1545 = vadd.f32 0.0, %v1544
        %v1546 = vpop.f32.mrb[0].mxu0
        %1547 = vmatprep.mubr.bf16.mxu0 0
        %1548 = vmatmul.mubr.bf16.gmra.mrb[0].mxu0 %v893
        %v1549 = vpop.f32.mrb[0].mxu0
        %v1550 = vadd.f32 0.0, %v1549
        %v1551 = vpop.f32.mrb[0].mxu0
        %v1552 = vpop.f32.mrb[0].mxu0
        %v1553 = vadd.f32 0.0, %v1552
        %v1554 = vpop.f32.mrb[0].mxu0
        %1555 = vmatprep.mubr.bf16.mxu0 0
        %1556 = vmatmul.mubr.bf16.gmra.mrb[0].mxu0 %v896
        %v1557 = vpop.f32.mrb[0].mxu0
        %v1558 = vadd.f32 0.0, %v1557
        %v1559 = vpop.f32.mrb[0].mxu0
        %v1560 = vpop.f32.mrb[0].mxu0
        %v1561 = vadd.f32 0.0, %v1560
        %v1562 = vpop.f32.mrb[0].mxu0
        %1563 = vmatprep.mubr.bf16.mxu0 0
        %1564 = vmatmul.mubr.bf16.gmra.mrb[0].mxu0 %v899
        %v1565 = vpop.f32.mrb[0].mxu0
        %v1566 = vadd.f32 0.0, %v1565
        %v1567 = vpop.f32.mrb[0].mxu0
        %v1568 = vpop.f32.mrb[0].mxu0
        %v1569 = vadd.f32 0.0, %v1568
        %v1570 = vpop.f32.mrb[0].mxu0
        %1571 = vmatprep.mubr.bf16.mxu0 0
        %1572 = vmatmul.mubr.bf16.gmra.mrb[0].mxu0 %v902
        %v1573 = vpop.f32.mrb[0].mxu0
        %v1574 = vadd.f32 0.0, %v1573
        %v1575 = vpop.f32.mrb[0].mxu0
        %v1576 = vpop.f32.mrb[0].mxu0
        %v1577 = vadd.f32 0.0, %v1576
        %v1578 = vpop.f32.mrb[0].mxu0
        %1579 = vmatprep.mubr.bf16.mxu0 0
        %1580 = vmatmul.mubr.bf16.gmra.mrb[0].mxu0 %v905
        %v1581 = vpop.f32.mrb[0].mxu0
        %v1582 = vadd.f32 0.0, %v1581
        %v1583 = vpop.f32.mrb[0].mxu0
        %v1584 = vpop.f32.mrb[0].mxu0
        %v1585 = vadd.f32 0.0, %v1584
        %v1586 = vpop.f32.mrb[0].mxu0
        %1587 = vmatprep.mubr.bf16.mxu0 0
        %1588 = vmatmul.mubr.bf16.gmra.mrb[0].mxu0 %v908
        %v1589 = vpop.f32.mrb[0].mxu0
        %v1590 = vadd.f32 0.0, %v1589
        %v1591 = vpop.f32.mrb[0].mxu0
        %v1592 = vpop.f32.mrb[0].mxu0
        %v1593 = vadd.f32 0.0, %v1592
        %v1594 = vpop.f32.mrb[0].mxu0
        %1595 = vmatprep.mubr.bf16.mxu0 0
        %1596 = vmatmul.mubr.bf16.gmra.mrb[0].mxu0 %v911
        %v1597 = vpop.f32.mrb[0].mxu0
        %v1598 = vadd.f32 0.0, %v1597
        %v1599 = vpop.f32.mrb[0].mxu0
        %v1600 = vpop.f32.mrb[0].mxu0
        %v1601 = vadd.f32 0.0, %v1600
        %v1602 = vpop.f32.mrb[0].mxu0
        %1603 = vmatprep.mubr.bf16.mxu0 0
        %1604 = vmatmul.mubr.bf16.gmra.mrb[0].mxu0 %v914
        %v1605 = vpop.f32.mrb[0].mxu0
        %v1606 = vadd.f32 0.0, %v1605
        %v1607 = vpop.f32.mrb[0].mxu0
        %v1608 = vpop.f32.mrb[0].mxu0
        %v1609 = vadd.f32 0.0, %v1608
        %v1610 = vpop.f32.mrb[0].mxu0
        %1611 = vmatprep.mubr.bf16.mxu0 0
        %1612 = vmatmul.mubr.bf16.gmra.mrb[0].mxu0 %v917
        %v1613 = vpop.f32.mrb[0].mxu0
        %v1614 = vadd.f32 0.0, %v1613
        %v1615 = vpop.f32.mrb[0].mxu0
        %v1616 = vpop.f32.mrb[0].mxu0
        %v1617 = vadd.f32 0.0, %v1616
        %v1618 = vpop.f32.mrb[0].mxu0
        %1619 = vmatprep.mubr.bf16.mxu0 0
        %1620 = vmatmul.mubr.bf16.gmra.mrb[0].mxu0 %v920
        %v1621 = vpop.f32.mrb[0].mxu0
        %v1622 = vadd.f32 0.0, %v1621
        %v1623 = vpop.f32.mrb[0].mxu0
        %v1624 = vpop.f32.mrb[0].mxu0
        %v1625 = vadd.f32 0.0, %v1624
        %v1626 = vpop.f32.mrb[0].mxu0
        %1627 = vmatprep.mubr.bf16.mxu0 0
        %1628 = vmatmul.mubr.bf16.gmra.mrb[0].mxu0 %v1491
        %v1629 = vpop.f32.mrb[0].mxu0
        %v1630 = vadd.f32 0.0, %v1629
        %v1631 = vpop.f32.mrb[0].mxu0
        %v1632 = vpop.f32.mrb[0].mxu0
        %v1633 = vadd.f32 0.0, %v1632
        %v1634 = vpop.f32.mrb[0].mxu0
        %1635 = vmatprep.mubr.bf16.mxu0 0
        %1636 = vmatmul.mubr.bf16.gmra.mrb[0].mxu0 %v1494
        %v1637 = vpop.f32.mrb[0].mxu0
        %v1638 = vadd.f32 0.0, %v1637
        %v1639 = vpop.f32.mrb[0].mxu0
        %v1640 = vpop.f32.mrb[0].mxu0
        %v1641 = vadd.f32 0.0, %v1640
        %v1642 = vpop.f32.mrb[0].mxu0
        %1643 = vdwg.mxu0
        %v1644 = vadd.f32 %v1456, %v1534
        %v1645 = vadd.f32 %v1457, %v1537
        %v1646 = vadd.f32 %v1458, %v1542
        %v1647 = vadd.f32 %v1459, %v1545
        %v1648 = vadd.f32 %v1460, %v1550
        %v1649 = vadd.f32 %v1461, %v1553
        %v1650 = vadd.f32 %v1462, %v1558
        %v1651 = vadd.f32 %v1463, %v1561
        %v1652 = vadd.f32 %v1464, %v1566
        %v1653 = vadd.f32 %v1465, %v1569
        %v1654 = vadd.f32 %v1466, %v1574
        %v1655 = vadd.f32 %v1467, %v1577
        %v1656 = vadd.f32 %v1468, %v1582
        %v1657 = vadd.f32 %v1469, %v1585
        %v1658 = vadd.f32 %v1470, %v1590
        %v1659 = vadd.f32 %v1471, %v1593
        %v1660 = vadd.f32 %v1472, %v1598
        %v1661 = vadd.f32 %v1473, %v1601
        %v1662 = vadd.f32 %v1474, %v1606
        %v1663 = vadd.f32 %v1475, %v1609
        %v1664 = vadd.f32 %v1476, %v1614
        %v1665 = vadd.f32 %v1477, %v1617
        %v1666 = vadd.f32 %v1478, %v1622
        %v1667 = vadd.f32 %v1479, %v1625
        %v1668 = vadd.f32 %v1480, %v1630
        %v1669 = vadd.f32 %v1481, %v1633
        %v1670 = vadd.f32 %v1482, %v1638
        %v1671 = vadd.f32 %v1483, %v1641
        %s1672 = scalar_lea.vmem [#allocation5], 12
        %v1673 = vld [vmem:[%s1672] sm:$0x3]
        %v1675 = vunpack.c.l.b16 %v288
        %v1676 = vpack.c.b16 %v1675, %v1288
        %v1678 = vsel %vm483, %v1676, 0
        %v1681 = vsel %vm526, %v1673, 0
        %1683 = vmatprep.subr.bf16.mxu0 0
        %1684 = vmatpush1.bf16.msra.mxu0 %v1681
        %1685 = vmatprep.subr.bf16.mxu0 0
        %1686 = vmatpush1.bf16.msra.mxu0 0
        %1687 = vmatprep.subr.bf16.mxu0 0
        %1688 = vmatpush1.bf16.msra.mxu0 0
        %1689 = vmatprep.subr.bf16.mxu0 0
        %1690 = vmatpush1.bf16.msra.mxu0 0
        %1691 = vmatprep.subr.bf16.mxu0 0
        %1692 = vmatpush1.bf16.msra.mxu0 0
        %1693 = vmatprep.subr.bf16.mxu0 0
        %1694 = vmatpush1.bf16.msra.mxu0 0
        %1695 = vmatprep.subr.bf16.mxu0 0
        %1696 = vmatpush1.bf16.msra.mxu0 0
        %1697 = vmatprep.subr.bf16.mxu0 0
        %1698 = vmatpush1.bf16.msra.mxu0 0
        %1699 = vmatprep.subr.bf16.mxu0 0
        %1700 = vmatpush1.bf16.msra.mxu0 0
        %1701 = vmatprep.subr.bf16.mxu0 0
        %1702 = vmatpush1.bf16.msra.mxu0 0
        %1703 = vmatprep.subr.bf16.mxu0 0
        %1704 = vmatpush1.bf16.msra.mxu0 0
        %1705 = vmatprep.subr.bf16.mxu0 0
        %1706 = vmatpush1.bf16.msra.mxu0 0
        %1707 = vmatprep.subr.bf16.mxu0 0
        %1708 = vmatpush1.bf16.msra.mxu0 0
        %1709 = vmatprep.subr.bf16.mxu0 0
        %1710 = vmatpush1.bf16.msra.mxu0 0
        %1711 = vmatprep.subr.bf16.mxu0 0
        %1712 = vmatpush1.bf16.msra.mxu0 0
        %1713 = vmatprep.subr.bf16.mxu0 0
        %1714 = vmatpush1.bf16.msra.mxu0 0
        %1715 = vmatprep.mubr.bf16.mxu0 0
        %1716 = vmatmul.mubr.bf16.gmra.mrb[0].mxu0 %v679
        %v1717 = vpop.f32.mrb[0].mxu0
        %v1718 = vadd.f32 0.0, %v1717
        %v1719 = vpop.f32.mrb[0].mxu0
        %v1720 = vpop.f32.mrb[0].mxu0
        %v1721 = vadd.f32 0.0, %v1720
        %v1722 = vpop.f32.mrb[0].mxu0
        %1723 = vmatprep.mubr.bf16.mxu0 0
        %1724 = vmatmul.mubr.bf16.gmra.mrb[0].mxu0 %v681
        %v1725 = vpop.f32.mrb[0].mxu0
        %v1726 = vadd.f32 0.0, %v1725
        %v1727 = vpop.f32.mrb[0].mxu0
        %v1728 = vpop.f32.mrb[0].mxu0
        %v1729 = vadd.f32 0.0, %v1728
        %v1730 = vpop.f32.mrb[0].mxu0
        %1731 = vmatprep.mubr.bf16.mxu0 0
        %1732 = vmatmul.mubr.bf16.gmra.mrb[0].mxu0 %v683
        %v1733 = vpop.f32.mrb[0].mxu0
        %v1734 = vadd.f32 0.0, %v1733
        %v1735 = vpop.f32.mrb[0].mxu0
        %v1736 = vpop.f32.mrb[0].mxu0
        %v1737 = vadd.f32 0.0, %v1736
        %v1738 = vpop.f32.mrb[0].mxu0
        %1739 = vmatprep.mubr.bf16.mxu0 0
        %1740 = vmatmul.mubr.bf16.gmra.mrb[0].mxu0 %v685
        %v1741 = vpop.f32.mrb[0].mxu0
        %v1742 = vadd.f32 0.0, %v1741
        %v1743 = vpop.f32.mrb[0].mxu0
        %v1744 = vpop.f32.mrb[0].mxu0
        %v1745 = vadd.f32 0.0, %v1744
        %v1746 = vpop.f32.mrb[0].mxu0
        %1747 = vmatprep.mubr.bf16.mxu0 0
        %1748 = vmatmul.mubr.bf16.gmra.mrb[0].mxu0 %v687
        %v1749 = vpop.f32.mrb[0].mxu0
        %v1750 = vadd.f32 0.0, %v1749
        %v1751 = vpop.f32.mrb[0].mxu0
        %v1752 = vpop.f32.mrb[0].mxu0
        %v1753 = vadd.f32 0.0, %v1752
        %v1754 = vpop.f32.mrb[0].mxu0
        %1755 = vmatprep.mubr.bf16.mxu0 0
        %1756 = vmatmul.mubr.bf16.gmra.mrb[0].mxu0 %v689
        %v1757 = vpop.f32.mrb[0].mxu0
        %v1758 = vadd.f32 0.0, %v1757
        %v1759 = vpop.f32.mrb[0].mxu0
        %v1760 = vpop.f32.mrb[0].mxu0
        %v1761 = vadd.f32 0.0, %v1760
        %v1762 = vpop.f32.mrb[0].mxu0
        %1763 = vmatprep.mubr.bf16.mxu0 0
        %1764 = vmatmul.mubr.bf16.gmra.mrb[0].mxu0 %v691
        %v1765 = vpop.f32.mrb[0].mxu0
        %v1766 = vadd.f32 0.0, %v1765
        %v1767 = vpop.f32.mrb[0].mxu0
        %v1768 = vpop.f32.mrb[0].mxu0
        %v1769 = vadd.f32 0.0, %v1768
        %v1770 = vpop.f32.mrb[0].mxu0
        %1771 = vmatprep.mubr.bf16.mxu0 0
        %1772 = vmatmul.mubr.bf16.gmra.mrb[0].mxu0 %v693
        %v1773 = vpop.f32.mrb[0].mxu0
        %v1774 = vadd.f32 0.0, %v1773
        %v1775 = vpop.f32.mrb[0].mxu0
        %v1776 = vpop.f32.mrb[0].mxu0
        %v1777 = vadd.f32 0.0, %v1776
        %v1778 = vpop.f32.mrb[0].mxu0
        %1779 = vmatprep.mubr.bf16.mxu0 0
        %1780 = vmatmul.mubr.bf16.gmra.mrb[0].mxu0 %v695
        %v1781 = vpop.f32.mrb[0].mxu0
        %v1782 = vadd.f32 0.0, %v1781
        %v1783 = vpop.f32.mrb[0].mxu0
        %v1784 = vpop.f32.mrb[0].mxu0
        %v1785 = vadd.f32 0.0, %v1784
        %v1786 = vpop.f32.mrb[0].mxu0
        %1787 = vmatprep.mubr.bf16.mxu0 0
        %1788 = vmatmul.mubr.bf16.gmra.mrb[0].mxu0 %v697
        %v1789 = vpop.f32.mrb[0].mxu0
        %v1790 = vadd.f32 0.0, %v1789
        %v1791 = vpop.f32.mrb[0].mxu0
        %v1792 = vpop.f32.mrb[0].mxu0
        %v1793 = vadd.f32 0.0, %v1792
        %v1794 = vpop.f32.mrb[0].mxu0
        %1795 = vmatprep.mubr.bf16.mxu0 0
        %1796 = vmatmul.mubr.bf16.gmra.mrb[0].mxu0 %v699
        %v1797 = vpop.f32.mrb[0].mxu0
        %v1798 = vadd.f32 0.0, %v1797
        %v1799 = vpop.f32.mrb[0].mxu0
        %v1800 = vpop.f32.mrb[0].mxu0
        %v1801 = vadd.f32 0.0, %v1800
        %v1802 = vpop.f32.mrb[0].mxu0
        %1803 = vmatprep.mubr.bf16.mxu0 0
        %1804 = vmatmul.mubr.bf16.gmra.mrb[0].mxu0 %v701
        %v1805 = vpop.f32.mrb[0].mxu0
        %v1806 = vadd.f32 0.0, %v1805
        %v1807 = vpop.f32.mrb[0].mxu0
        %v1808 = vpop.f32.mrb[0].mxu0
        %v1809 = vadd.f32 0.0, %v1808
        %v1810 = vpop.f32.mrb[0].mxu0
        %1811 = vmatprep.mubr.bf16.mxu0 0
        %1812 = vmatmul.mubr.bf16.gmra.mrb[0].mxu0 %v1107
        %v1813 = vpop.f32.mrb[0].mxu0
        %v1814 = vadd.f32 0.0, %v1813
        %v1815 = vpop.f32.mrb[0].mxu0
        %v1816 = vpop.f32.mrb[0].mxu0
        %v1817 = vadd.f32 0.0, %v1816
        %v1818 = vpop.f32.mrb[0].mxu0
        %1819 = vmatprep.mubr.bf16.mxu0 0
        %1820 = vmatmul.mubr.bf16.gmra.mrb[0].mxu0 %v1678
        %v1821 = vpop.f32.mrb[0].mxu0
        %v1822 = vadd.f32 0.0, %v1821
        %v1823 = vpop.f32.mrb[0].mxu0
        %v1824 = vpop.f32.mrb[0].mxu0
        %v1825 = vadd.f32 0.0, %v1824
        %v1826 = vpop.f32.mrb[0].mxu0
        %1827 = vdwg.mxu0
        %v1828 = vadd.f32 %v1644, %v1718
        %v1829 = vadd.f32 %v1645, %v1721
        %v1830 = vadd.f32 %v1646, %v1726
        %v1831 = vadd.f32 %v1647, %v1729
        %v1832 = vadd.f32 %v1648, %v1734
        %v1833 = vadd.f32 %v1649, %v1737
        %v1834 = vadd.f32 %v1650, %v1742
        %v1835 = vadd.f32 %v1651, %v1745
        %v1836 = vadd.f32 %v1652, %v1750
        %v1837 = vadd.f32 %v1653, %v1753
        %v1838 = vadd.f32 %v1654, %v1758
        %v1839 = vadd.f32 %v1655, %v1761
        %v1840 = vadd.f32 %v1656, %v1766
        %v1841 = vadd.f32 %v1657, %v1769
        %v1842 = vadd.f32 %v1658, %v1774
        %v1843 = vadd.f32 %v1659, %v1777
        %v1844 = vadd.f32 %v1660, %v1782
        %v1845 = vadd.f32 %v1661, %v1785
        %v1846 = vadd.f32 %v1662, %v1790
        %v1847 = vadd.f32 %v1663, %v1793
        %v1848 = vadd.f32 %v1664, %v1798
        %v1849 = vadd.f32 %v1665, %v1801
        %v1850 = vadd.f32 %v1666, %v1806
        %v1851 = vadd.f32 %v1667, %v1809
        %v1852 = vadd.f32 %v1668, %v1814
        %v1853 = vadd.f32 %v1669, %v1817
        %v1854 = vadd.f32 %v1670, %v1822
        %v1855 = vadd.f32 %v1671, %v1825
        %s1856 = scalar_lea.vmem [#allocation5], 14
        %v1857 = vld [vmem:[%s1856] sm:$0x3]
        %v1859 = vunpack.c.l.b16 %v289
        %v1860 = vpack.c.b16 %v1859, %v1859
        %v1861 = vshll.u32 %v1676, 16
        %v1863 = vrot.slane %v1861, 1
        %v1864 = vsel %vm366, %v1296, %v1863
        %v1865 = vshrl.u32 %v1676, 16
        %v1867 = vor.u32 %v1865, %v1863
        %v1869 = vshll.u32 %v1860, 16
        %v1871 = vrot.slane %v1869, 1
        %v1872 = vsel %vm366, %v1867, %v1871
        %v1874 = vsel %vm483, %v1864, 0
        %v1877 = vsel %vm483, %v1872, 0
        %v1880 = vsel %vm526, %v1857, 0
        %1882 = vmatprep.subr.bf16.mxu0 0
        %1883 = vmatpush1.bf16.msra.mxu0 %v1880
        %1884 = vmatprep.subr.bf16.mxu0 0
        %1885 = vmatpush1.bf16.msra.mxu0 0
        %1886 = vmatprep.subr.bf16.mxu0 0
        %1887 = vmatpush1.bf16.msra.mxu0 0
        %1888 = vmatprep.subr.bf16.mxu0 0
        %1889 = vmatpush1.bf16.msra.mxu0 0
        %1890 = vmatprep.subr.bf16.mxu0 0
        %1891 = vmatpush1.bf16.msra.mxu0 0
        %1892 = vmatprep.subr.bf16.mxu0 0
        %1893 = vmatpush1.bf16.msra.mxu0 0
        %1894 = vmatprep.subr.bf16.mxu0 0
        %1895 = vmatpush1.bf16.msra.mxu0 0
        %1896 = vmatprep.subr.bf16.mxu0 0
        %1897 = vmatpush1.bf16.msra.mxu0 0
        %1898 = vmatprep.subr.bf16.mxu0 0
        %1899 = vmatpush1.bf16.msra.mxu0 0
        %1900 = vmatprep.subr.bf16.mxu0 0
        %1901 = vmatpush1.bf16.msra.mxu0 0
        %1902 = vmatprep.subr.bf16.mxu0 0
        %1903 = vmatpush1.bf16.msra.mxu0 0
        %1904 = vmatprep.subr.bf16.mxu0 0
        %1905 = vmatpush1.bf16.msra.mxu0 0
        %1906 = vmatprep.subr.bf16.mxu0 0
        %1907 = vmatpush1.bf16.msra.mxu0 0
        %1908 = vmatprep.subr.bf16.mxu0 0
        %1909 = vmatpush1.bf16.msra.mxu0 0
        %1910 = vmatprep.subr.bf16.mxu0 0
        %1911 = vmatpush1.bf16.msra.mxu0 0
        %1912 = vmatprep.subr.bf16.mxu0 0
        %1913 = vmatpush1.bf16.msra.mxu0 0
        %1914 = vmatprep.mubr.bf16.mxu0 0
        %1915 = vmatmul.mubr.bf16.gmra.mrb[0].mxu0 %v491
        %v1916 = vpop.f32.mrb[0].mxu0
        %v1917 = vadd.f32 0.0, %v1916
        %v1918 = vpop.f32.mrb[0].mxu0
        %v1919 = vpop.f32.mrb[0].mxu0
        %v1920 = vadd.f32 0.0, %v1919
        %v1921 = vpop.f32.mrb[0].mxu0
        %1922 = vmatprep.mubr.bf16.mxu0 0
        %1923 = vmatmul.mubr.bf16.gmra.mrb[0].mxu0 %v494
        %v1924 = vpop.f32.mrb[0].mxu0
        %v1925 = vadd.f32 0.0, %v1924
        %v1926 = vpop.f32.mrb[0].mxu0
        %v1927 = vpop.f32.mrb[0].mxu0
        %v1928 = vadd.f32 0.0, %v1927
        %v1929 = vpop.f32.mrb[0].mxu0
        %1930 = vmatprep.mubr.bf16.mxu0 0
        %1931 = vmatmul.mubr.bf16.gmra.mrb[0].mxu0 %v497
        %v1932 = vpop.f32.mrb[0].mxu0
        %v1933 = vadd.f32 0.0, %v1932
        %v1934 = vpop.f32.mrb[0].mxu0
        %v1935 = vpop.f32.mrb[0].mxu0
        %v1936 = vadd.f32 0.0, %v1935
        %v1937 = vpop.f32.mrb[0].mxu0
        %1938 = vmatprep.mubr.bf16.mxu0 0
        %1939 = vmatmul.mubr.bf16.gmra.mrb[0].mxu0 %v500
        %v1940 = vpop.f32.mrb[0].mxu0
        %v1941 = vadd.f32 0.0, %v1940
        %v1942 = vpop.f32.mrb[0].mxu0
        %v1943 = vpop.f32.mrb[0].mxu0
        %v1944 = vadd.f32 0.0, %v1943
        %v1945 = vpop.f32.mrb[0].mxu0
        %1946 = vmatprep.mubr.bf16.mxu0 0
        %1947 = vmatmul.mubr.bf16.gmra.mrb[0].mxu0 %v503
        %v1948 = vpop.f32.mrb[0].mxu0
        %v1949 = vadd.f32 0.0, %v1948
        %v1950 = vpop.f32.mrb[0].mxu0
        %v1951 = vpop.f32.mrb[0].mxu0
        %v1952 = vadd.f32 0.0, %v1951
        %v1953 = vpop.f32.mrb[0].mxu0
        %1954 = vmatprep.mubr.bf16.mxu0 0
        %1955 = vmatmul.mubr.bf16.gmra.mrb[0].mxu0 %v506
        %v1956 = vpop.f32.mrb[0].mxu0
        %v1957 = vadd.f32 0.0, %v1956
        %v1958 = vpop.f32.mrb[0].mxu0
        %v1959 = vpop.f32.mrb[0].mxu0
        %v1960 = vadd.f32 0.0, %v1959
        %v1961 = vpop.f32.mrb[0].mxu0
        %1962 = vmatprep.mubr.bf16.mxu0 0
        %1963 = vmatmul.mubr.bf16.gmra.mrb[0].mxu0 %v509
        %v1964 = vpop.f32.mrb[0].mxu0
        %v1965 = vadd.f32 0.0, %v1964
        %v1966 = vpop.f32.mrb[0].mxu0
        %v1967 = vpop.f32.mrb[0].mxu0
        %v1968 = vadd.f32 0.0, %v1967
        %v1969 = vpop.f32.mrb[0].mxu0
        %1970 = vmatprep.mubr.bf16.mxu0 0
        %1971 = vmatmul.mubr.bf16.gmra.mrb[0].mxu0 %v512
        %v1972 = vpop.f32.mrb[0].mxu0
        %v1973 = vadd.f32 0.0, %v1972
        %v1974 = vpop.f32.mrb[0].mxu0
        %v1975 = vpop.f32.mrb[0].mxu0
        %v1976 = vadd.f32 0.0, %v1975
        %v1977 = vpop.f32.mrb[0].mxu0
        %1978 = vmatprep.mubr.bf16.mxu0 0
        %1979 = vmatmul.mubr.bf16.gmra.mrb[0].mxu0 %v515
        %v1980 = vpop.f32.mrb[0].mxu0
        %v1981 = vadd.f32 0.0, %v1980
        %v1982 = vpop.f32.mrb[0].mxu0
        %v1983 = vpop.f32.mrb[0].mxu0
        %v1984 = vadd.f32 0.0, %v1983
        %v1985 = vpop.f32.mrb[0].mxu0
        %1986 = vmatprep.mubr.bf16.mxu0 0
        %1987 = vmatmul.mubr.bf16.gmra.mrb[0].mxu0 %v518
        %v1988 = vpop.f32.mrb[0].mxu0
        %v1989 = vadd.f32 0.0, %v1988
        %v1990 = vpop.f32.mrb[0].mxu0
        %v1991 = vpop.f32.mrb[0].mxu0
        %v1992 = vadd.f32 0.0, %v1991
        %v1993 = vpop.f32.mrb[0].mxu0
        %1994 = vmatprep.mubr.bf16.mxu0 0
        %1995 = vmatmul.mubr.bf16.gmra.mrb[0].mxu0 %v521
        %v1996 = vpop.f32.mrb[0].mxu0
        %v1997 = vadd.f32 0.0, %v1996
        %v1998 = vpop.f32.mrb[0].mxu0
        %v1999 = vpop.f32.mrb[0].mxu0
        %v2000 = vadd.f32 0.0, %v1999
        %v2001 = vpop.f32.mrb[0].mxu0
        %2002 = vmatprep.mubr.bf16.mxu0 0
        %2003 = vmatmul.mubr.bf16.gmra.mrb[0].mxu0 %v1303
        %v2004 = vpop.f32.mrb[0].mxu0
        %v2005 = vadd.f32 0.0, %v2004
        %v2006 = vpop.f32.mrb[0].mxu0
        %v2007 = vpop.f32.mrb[0].mxu0
        %v2008 = vadd.f32 0.0, %v2007
        %v2009 = vpop.f32.mrb[0].mxu0
        %2010 = vmatprep.mubr.bf16.mxu0 0
        %2011 = vmatmul.mubr.bf16.gmra.mrb[0].mxu0 %v1874
        %v2012 = vpop.f32.mrb[0].mxu0
        %v2013 = vadd.f32 0.0, %v2012
        %v2014 = vpop.f32.mrb[0].mxu0
        %v2015 = vpop.f32.mrb[0].mxu0
        %v2016 = vadd.f32 0.0, %v2015
        %v2017 = vpop.f32.mrb[0].mxu0
        %2018 = vmatprep.mubr.bf16.mxu0 0
        %2019 = vmatmul.mubr.bf16.gmra.mrb[0].mxu0 %v1877
        %v2020 = vpop.f32.mrb[0].mxu0
        %v2021 = vadd.f32 0.0, %v2020
        %v2022 = vpop.f32.mrb[0].mxu0
        %v2023 = vpop.f32.mrb[0].mxu0
        %v2024 = vadd.f32 0.0, %v2023
        %v2025 = vpop.f32.mrb[0].mxu0
        %2026 = vdwg.mxu0
        %v2027 = vadd.f32 %v1828, %v1917
        %v2028 = vadd.f32 %v1829, %v1920
        %v2029 = vadd.f32 %v1830, %v1925
        %v2030 = vadd.f32 %v1831, %v1928
        %v2031 = vadd.f32 %v1832, %v1933
        %v2032 = vadd.f32 %v1833, %v1936
        %v2033 = vadd.f32 %v1834, %v1941
        %v2034 = vadd.f32 %v1835, %v1944
        %v2035 = vadd.f32 %v1836, %v1949
        %v2036 = vadd.f32 %v1837, %v1952
        %v2037 = vadd.f32 %v1838, %v1957
        %v2038 = vadd.f32 %v1839, %v1960
        %v2039 = vadd.f32 %v1840, %v1965
        %v2040 = vadd.f32 %v1841, %v1968
        %v2041 = vadd.f32 %v1842, %v1973
        %v2042 = vadd.f32 %v1843, %v1976
        %v2043 = vadd.f32 %v1844, %v1981
        %v2044 = vadd.f32 %v1845, %v1984
        %v2045 = vadd.f32 %v1846, %v1989
        %v2046 = vadd.f32 %v1847, %v1992
        %v2047 = vadd.f32 %v1848, %v1997
        %v2048 = vadd.f32 %v1849, %v2000
        %v2049 = vadd.f32 %v1850, %v2005
        %v2050 = vadd.f32 %v1851, %v2008
        %v2051 = vadd.f32 %v1852, %v2013
        %v2052 = vadd.f32 %v1853, %v2016
        %v2053 = vadd.f32 %v1854, %v2021
        %v2054 = vadd.f32 %v1855, %v2024
        %s2055 = scalar_lea.vmem [#allocation5], 16
        %v2056 = vld [vmem:[%s2055] sm:$0x3]
        %v2057 = vrot.slane %v1676, 1
        %v2058 = vsel %vm853, %v1486, %v2057
        %v2059 = vrot.slane %v1860, 1
        %v2060 = vsel %vm853, %v2057, %v2059
        %v2062 = vsel %vm483, %v2058, 0
        %v2065 = vsel %vm483, %v2060, 0
        %v2068 = vsel %vm526, %v2056, 0
        %2070 = vmatprep.subr.bf16.mxu0 0
        %2071 = vmatpush1.bf16.msra.mxu0 %v2068
        %2072 = vmatprep.subr.bf16.mxu0 0
        %2073 = vmatpush1.bf16.msra.mxu0 0
        %2074 = vmatprep.subr.bf16.mxu0 0
        %2075 = vmatpush1.bf16.msra.mxu0 0
        %2076 = vmatprep.subr.bf16.mxu0 0
        %2077 = vmatpush1.bf16.msra.mxu0 0
        %2078 = vmatprep.subr.bf16.mxu0 0
        %2079 = vmatpush1.bf16.msra.mxu0 0
        %2080 = vmatprep.subr.bf16.mxu0 0
        %2081 = vmatpush1.bf16.msra.mxu0 0
        %2082 = vmatprep.subr.bf16.mxu0 0
        %2083 = vmatpush1.bf16.msra.mxu0 0
        %2084 = vmatprep.subr.bf16.mxu0 0
        %2085 = vmatpush1.bf16.msra.mxu0 0
        %2086 = vmatprep.subr.bf16.mxu0 0
        %2087 = vmatpush1.bf16.msra.mxu0 0
        %2088 = vmatprep.subr.bf16.mxu0 0
        %2089 = vmatpush1.bf16.msra.mxu0 0
        %2090 = vmatprep.subr.bf16.mxu0 0
        %2091 = vmatpush1.bf16.msra.mxu0 0
        %2092 = vmatprep.subr.bf16.mxu0 0
        %2093 = vmatpush1.bf16.msra.mxu0 0
        %2094 = vmatprep.subr.bf16.mxu0 0
        %2095 = vmatpush1.bf16.msra.mxu0 0
        %2096 = vmatprep.subr.bf16.mxu0 0
        %2097 = vmatpush1.bf16.msra.mxu0 0
        %2098 = vmatprep.subr.bf16.mxu0 0
        %2099 = vmatpush1.bf16.msra.mxu0 0
        %2100 = vmatprep.subr.bf16.mxu0 0
        %2101 = vmatpush1.bf16.msra.mxu0 0
        %2102 = vmatprep.mubr.bf16.mxu0 0
        %2103 = vmatmul.mubr.bf16.gmra.mrb[0].mxu0 %v890
        %v2104 = vpop.f32.mrb[0].mxu0
        %v2105 = vadd.f32 0.0, %v2104
        %v2106 = vpop.f32.mrb[0].mxu0
        %v2107 = vpop.f32.mrb[0].mxu0
        %v2108 = vadd.f32 0.0, %v2107
        %v2109 = vpop.f32.mrb[0].mxu0
        %2110 = vmatprep.mubr.bf16.mxu0 0
        %2111 = vmatmul.mubr.bf16.gmra.mrb[0].mxu0 %v893
        %v2112 = vpop.f32.mrb[0].mxu0
        %v2113 = vadd.f32 0.0, %v2112
        %v2114 = vpop.f32.mrb[0].mxu0
        %v2115 = vpop.f32.mrb[0].mxu0
        %v2116 = vadd.f32 0.0, %v2115
        %v2117 = vpop.f32.mrb[0].mxu0
        %2118 = vmatprep.mubr.bf16.mxu0 0
        %2119 = vmatmul.mubr.bf16.gmra.mrb[0].mxu0 %v896
        %v2120 = vpop.f32.mrb[0].mxu0
        %v2121 = vadd.f32 0.0, %v2120
        %v2122 = vpop.f32.mrb[0].mxu0
        %v2123 = vpop.f32.mrb[0].mxu0
        %v2124 = vadd.f32 0.0, %v2123
        %v2125 = vpop.f32.mrb[0].mxu0
        %2126 = vmatprep.mubr.bf16.mxu0 0
        %2127 = vmatmul.mubr.bf16.gmra.mrb[0].mxu0 %v899
        %v2128 = vpop.f32.mrb[0].mxu0
        %v2129 = vadd.f32 0.0, %v2128
        %v2130 = vpop.f32.mrb[0].mxu0
        %v2131 = vpop.f32.mrb[0].mxu0
        %v2132 = vadd.f32 0.0, %v2131
        %v2133 = vpop.f32.mrb[0].mxu0
        %2134 = vmatprep.mubr.bf16.mxu0 0
        %2135 = vmatmul.mubr.bf16.gmra.mrb[0].mxu0 %v902
        %v2136 = vpop.f32.mrb[0].mxu0
        %v2137 = vadd.f32 0.0, %v2136
        %v2138 = vpop.f32.mrb[0].mxu0
        %v2139 = vpop.f32.mrb[0].mxu0
        %v2140 = vadd.f32 0.0, %v2139
        %v2141 = vpop.f32.mrb[0].mxu0
        %2142 = vmatprep.mubr.bf16.mxu0 0
        %2143 = vmatmul.mubr.bf16.gmra.mrb[0].mxu0 %v905
        %v2144 = vpop.f32.mrb[0].mxu0
        %v2145 = vadd.f32 0.0, %v2144
        %v2146 = vpop.f32.mrb[0].mxu0
        %v2147 = vpop.f32.mrb[0].mxu0
        %v2148 = vadd.f32 0.0, %v2147
        %v2149 = vpop.f32.mrb[0].mxu0
        %2150 = vmatprep.mubr.bf16.mxu0 0
        %2151 = vmatmul.mubr.bf16.gmra.mrb[0].mxu0 %v908
        %v2152 = vpop.f32.mrb[0].mxu0
        %v2153 = vadd.f32 0.0, %v2152
        %v2154 = vpop.f32.mrb[0].mxu0
        %v2155 = vpop.f32.mrb[0].mxu0
        %v2156 = vadd.f32 0.0, %v2155
        %v2157 = vpop.f32.mrb[0].mxu0
        %2158 = vmatprep.mubr.bf16.mxu0 0
        %2159 = vmatmul.mubr.bf16.gmra.mrb[0].mxu0 %v911
        %v2160 = vpop.f32.mrb[0].mxu0
        %v2161 = vadd.f32 0.0, %v2160
        %v2162 = vpop.f32.mrb[0].mxu0
        %v2163 = vpop.f32.mrb[0].mxu0
        %v2164 = vadd.f32 0.0, %v2163
        %v2165 = vpop.f32.mrb[0].mxu0
        %2166 = vmatprep.mubr.bf16.mxu0 0
        %2167 = vmatmul.mubr.bf16.gmra.mrb[0].mxu0 %v914
        %v2168 = vpop.f32.mrb[0].mxu0
        %v2169 = vadd.f32 0.0, %v2168
        %v2170 = vpop.f32.mrb[0].mxu0
        %v2171 = vpop.f32.mrb[0].mxu0
        %v2172 = vadd.f32 0.0, %v2171
        %v2173 = vpop.f32.mrb[0].mxu0
        %2174 = vmatprep.mubr.bf16.mxu0 0
        %2175 = vmatmul.mubr.bf16.gmra.mrb[0].mxu0 %v917
        %v2176 = vpop.f32.mrb[0].mxu0
        %v2177 = vadd.f32 0.0, %v2176
        %v2178 = vpop.f32.mrb[0].mxu0
        %v2179 = vpop.f32.mrb[0].mxu0
        %v2180 = vadd.f32 0.0, %v2179
        %v2181 = vpop.f32.mrb[0].mxu0
        %2182 = vmatprep.mubr.bf16.mxu0 0
        %2183 = vmatmul.mubr.bf16.gmra.mrb[0].mxu0 %v920
        %v2184 = vpop.f32.mrb[0].mxu0
        %v2185 = vadd.f32 0.0, %v2184
        %v2186 = vpop.f32.mrb[0].mxu0
        %v2187 = vpop.f32.mrb[0].mxu0
        %v2188 = vadd.f32 0.0, %v2187
        %v2189 = vpop.f32.mrb[0].mxu0
        %2190 = vmatprep.mubr.bf16.mxu0 0
        %2191 = vmatmul.mubr.bf16.gmra.mrb[0].mxu0 %v1491
        %v2192 = vpop.f32.mrb[0].mxu0
        %v2193 = vadd.f32 0.0, %v2192
        %v2194 = vpop.f32.mrb[0].mxu0
        %v2195 = vpop.f32.mrb[0].mxu0
        %v2196 = vadd.f32 0.0, %v2195
        %v2197 = vpop.f32.mrb[0].mxu0
        %2198 = vmatprep.mubr.bf16.mxu0 0
        %2199 = vmatmul.mubr.bf16.gmra.mrb[0].mxu0 %v2062
        %v2200 = vpop.f32.mrb[0].mxu0
        %v2201 = vadd.f32 0.0, %v2200
        %v2202 = vpop.f32.mrb[0].mxu0
        %v2203 = vpop.f32.mrb[0].mxu0
        %v2204 = vadd.f32 0.0, %v2203
        %v2205 = vpop.f32.mrb[0].mxu0
        %2206 = vmatprep.mubr.bf16.mxu0 0
        %2207 = vmatmul.mubr.bf16.gmra.mrb[0].mxu0 %v2065
        %v2208 = vpop.f32.mrb[0].mxu0
        %v2209 = vadd.f32 0.0, %v2208
        %v2210 = vpop.f32.mrb[0].mxu0
        %v2211 = vpop.f32.mrb[0].mxu0
        %v2212 = vadd.f32 0.0, %v2211
        %v2213 = vpop.f32.mrb[0].mxu0
        %2214 = vdwg.mxu0
        %v2215 = vadd.f32 %v2027, %v2105
        %v2216 = vadd.f32 %v2028, %v2108
        %v2217 = vadd.f32 %v2029, %v2113
        %v2218 = vadd.f32 %v2030, %v2116
        %v2219 = vadd.f32 %v2031, %v2121
        %v2220 = vadd.f32 %v2032, %v2124
        %v2221 = vadd.f32 %v2033, %v2129
        %v2222 = vadd.f32 %v2034, %v2132
        %v2223 = vadd.f32 %v2035, %v2137
        %v2224 = vadd.f32 %v2036, %v2140
        %v2225 = vadd.f32 %v2037, %v2145
        %v2226 = vadd.f32 %v2038, %v2148
        %v2227 = vadd.f32 %v2039, %v2153
        %v2228 = vadd.f32 %v2040, %v2156
        %v2229 = vadd.f32 %v2041, %v2161
        %v2230 = vadd.f32 %v2042, %v2164
        %v2231 = vadd.f32 %v2043, %v2169
        %v2232 = vadd.f32 %v2044, %v2172
        %v2233 = vadd.f32 %v2045, %v2177
        %v2234 = vadd.f32 %v2046, %v2180
        %v2235 = vadd.f32 %v2047, %v2185
        %v2236 = vadd.f32 %v2048, %v2188
        %v2237 = vadd.f32 %v2049, %v2193
        %v2238 = vadd.f32 %v2050, %v2196
        %v2239 = vadd.f32 %v2051, %v2201
        %v2240 = vadd.f32 %v2052, %v2204
        %v2241 = vadd.f32 %v2053, %v2209
        %v2242 = vadd.f32 %v2054, %v2212
        %v2243 = vpack.c.bf16 %v2216, %v2215
        %v2244 = vpack.c.bf16 %v2218, %v2217
        %v2245 = vpack.c.bf16 %v2220, %v2219
        %v2246 = vpack.c.bf16 %v2222, %v2221
        %v2247 = vpack.c.bf16 %v2224, %v2223
        %v2248 = vpack.c.bf16 %v2226, %v2225
        %v2249 = vpack.c.bf16 %v2228, %v2227
        %v2250 = vpack.c.bf16 %v2230, %v2229
        %v2251 = vpack.c.bf16 %v2232, %v2231
        %v2252 = vpack.c.bf16 %v2234, %v2233
        %v2253 = vpack.c.bf16 %v2236, %v2235
        %v2254 = vpack.c.bf16 %v2238, %v2237
        %v2255 = vpack.c.bf16 %v2240, %v2239
        %v2256 = vpack.c.bf16 %v2242, %v2241
        %v2271 = vunpack.c.l.b16 %v2243
        %v2272 = vunpack.c.h.b16 %v2243
        %v2273 = vunpack.c.l.b16 %v2244
        %v2274 = vunpack.c.h.b16 %v2244
        %v2275 = vunpack.c.l.b16 %v2245
        %v2276 = vunpack.c.h.b16 %v2245
        %v2277 = vunpack.c.l.b16 %v2246
        %v2278 = vunpack.c.h.b16 %v2246
        %v2279 = vunpack.c.l.b16 %v2247
        %v2280 = vunpack.c.h.b16 %v2247
        %v2281 = vunpack.c.l.b16 %v2248
        %v2282 = vunpack.c.h.b16 %v2248
        %v2283 = vunpack.c.l.b16 %v2249
        %v2284 = vunpack.c.h.b16 %v2249
        %v2285 = vunpack.c.l.b16 %v2250
        %v2286 = vunpack.c.h.b16 %v2250
        %v2287 = vunpack.c.l.b16 %v2251
        %v2288 = vunpack.c.h.b16 %v2251
        %v2289 = vunpack.c.l.b16 %v2252
        %v2290 = vunpack.c.h.b16 %v2252
        %v2291 = vunpack.c.l.b16 %v2253
        %v2292 = vunpack.c.h.b16 %v2253
        %v2293 = vunpack.c.l.b16 %v2254
        %v2294 = vunpack.c.h.b16 %v2254
        %v2295 = vunpack.c.l.b16 %v2255
        %v2296 = vunpack.c.h.b16 %v2255
        %v2297 = vunpack.c.l.b16 %v2256
        %v2298 = vunpack.c.h.b16 %v2256
        %v2299 = vpack.c.b16 %v2271, %v2271
        %v2300 = vpack.c.b16 %v2272, %v2272
        %v2301 = vpack.c.b16 %v2273, %v2273
        %v2302 = vpack.c.b16 %v2274, %v2274
        %v2303 = vpack.c.b16 %v2275, %v2275
        %v2304 = vpack.c.b16 %v2276, %v2276
        %v2305 = vpack.c.b16 %v2277, %v2277
        %v2306 = vpack.c.b16 %v2278, %v2278
        %v2307 = vpack.c.b16 %v2279, %v2279
        %v2308 = vpack.c.b16 %v2280, %v2280
        %v2309 = vpack.c.b16 %v2281, %v2281
        %v2310 = vpack.c.b16 %v2282, %v2282
        %v2311 = vpack.c.b16 %v2283, %v2283
        %v2312 = vpack.c.b16 %v2284, %v2284
        %v2313 = vpack.c.b16 %v2285, %v2285
        %v2314 = vpack.c.b16 %v2286, %v2286
        %v2315 = vpack.c.b16 %v2287, %v2287
        %v2316 = vpack.c.b16 %v2288, %v2288
        %v2317 = vpack.c.b16 %v2289, %v2289
        %v2318 = vpack.c.b16 %v2290, %v2290
        %v2319 = vpack.c.b16 %v2291, %v2291
        %v2320 = vpack.c.b16 %v2292, %v2292
        %v2321 = vpack.c.b16 %v2293, %v2293
        %v2322 = vpack.c.b16 %v2294, %v2294
        %v2323 = vpack.c.b16 %v2295, %v2295
        %v2324 = vpack.c.b16 %v2296, %v2296
        %v2325 = vpack.c.b16 %v2297, %v2297
        %v2326 = vpack.c.b16 %v2298, %v2298
        %2355 = vst [vmem:[%s248] sm:$0xf] %v2299
        %2356 = vst [vmem:[%s248 + $0x4] sm:$0xf] %v2300
        %2357 = vst [vmem:[%s248 + $0x8] sm:$0xf] %v2301
        %2358 = vst [vmem:[%s248 + $0xc] sm:$0xf] %v2302
        %2359 = vst [vmem:[%s248 + $0x10] sm:$0xf] %v2303
        %2360 = vst [vmem:[%s248 + $0x14] sm:$0xf] %v2304
        %2361 = vst [vmem:[%s248 + $0x18] sm:$0xf] %v2305
        %2362 = vst [vmem:[%s248 + $0x1c] sm:$0xf] %v2306
        %2363 = vst [vmem:[%s248 + $0x20] sm:$0xf] %v2307
        %2364 = vst [vmem:[%s248 + $0x24] sm:$0xf] %v2308
        %2365 = vst [vmem:[%s248 + $0x28] sm:$0xf] %v2309
        %2366 = vst [vmem:[%s248 + $0x2c] sm:$0xf] %v2310
        %2367 = vst [vmem:[%s248 + $0x30] sm:$0xf] %v2311
        %2368 = vst [vmem:[%s248 + $0x34] sm:$0xf] %v2312
        %2369 = vst [vmem:[%s248 + $0x38] sm:$0xf] %v2313
        %2370 = vst [vmem:[%s248 + $0x3c] sm:$0xf] %v2314
        %2371 = vst [vmem:[%s248 + $0x40] sm:$0xf] %v2315
        %2372 = vst [vmem:[%s248 + $0x44] sm:$0xf] %v2316
        %2373 = vst [vmem:[%s248 + $0x48] sm:$0xf] %v2317
        %2374 = vst [vmem:[%s248 + $0x4c] sm:$0xf] %v2318
        %2375 = vst [vmem:[%s248 + $0x50] sm:$0xf] %v2319
        %2376 = vst [vmem:[%s248 + $0x54] sm:$0xf] %v2320
        %2377 = vst [vmem:[%s248 + $0x58] sm:$0xf] %v2321
        %2378 = vst [vmem:[%s248 + $0x5c] sm:$0xf] %v2322
        %2379 = vst [vmem:[%s248 + $0x60] sm:$0xf] %v2323
        %2380 = vst [vmem:[%s248 + $0x64] sm:$0xf] %v2324
        %2381 = vst [vmem:[%s248 + $0x68] sm:$0xf] %v2325
        %2382 = vst [vmem:[%s248 + $0x6c] sm:$0xf] %v2326
        %v2383 = vld [vmem:[#allocation7] sm:$0xff]
        %v2384 = vld [vmem:[#allocation7 + $0x8] sm:$0xff]
        %v2385 = vld [vmem:[#allocation7 + $0x10] sm:$0xff]
        %v2386 = vld [vmem:[#allocation7 + $0x18] sm:$0xff]
        %v2387 = vld [vmem:[#allocation7 + $0x20] sm:$0xff]
        %v2388 = vld [vmem:[#allocation7 + $0x28] sm:$0xff]
        %v2389 = vld [vmem:[#allocation7 + $0x30] sm:$0xff]
        %v2390 = vld [vmem:[#allocation7 + $0x38] sm:$0xff]
        %v2391 = vld [vmem:[#allocation7 + $0x40] sm:$0xff]
        %v2392 = vld [vmem:[#allocation7 + $0x48] sm:$0xff]
        %v2393 = vld [vmem:[#allocation7 + $0x50] sm:$0xff]
        %v2394 = vld [vmem:[#allocation7 + $0x58] sm:$0xff]
        %v2395 = vld [vmem:[#allocation7 + $0x60] sm:$0xff]
        %v2396 = vld [vmem:[#allocation7 + $0x68] sm:$0xff]
        %v2397 = vld [vmem:[#allocation7 + $0x70] sm:$0xff]
        %v2398 = vld [vmem:[#allocation7 + $0x78] sm:$0xff]
        %v2399 = vld [vmem:[#allocation7 + $0x80] sm:$0xff]
        %v2400 = vld [vmem:[#allocation7 + $0x88] sm:$0xff]
        %v2401 = vld [vmem:[#allocation7 + $0x90] sm:$0xff]
        %v2402 = vld [vmem:[#allocation7 + $0x98] sm:$0xff]
        %v2403 = vld [vmem:[#allocation7 + $0xa0] sm:$0xff]
        %v2404 = vld [vmem:[#allocation7 + $0xa8] sm:$0xff]
        %v2405 = vld [vmem:[#allocation7 + $0xb0] sm:$0xff]
        %v2406 = vld [vmem:[#allocation7 + $0xb8] sm:$0xff]
        %v2407 = vld [vmem:[#allocation7 + $0xc0] sm:$0xff]
        %v2408 = vld [vmem:[#allocation7 + $0xc8] sm:$0xff]
        %v2409 = vld [vmem:[#allocation7 + $0xd0] sm:$0xff]
        %v2410 = vld [vmem:[#allocation7 + $0xd8] sm:$0xff]
        %2412 = vset.pattern.permute.xlu0 0
        %2413 = vperm.xlu0 %2412, %v2383
        %v2414 = vpop.permute.xlu0 %2413
        %2417 = vset.pattern.permute.xlu0 0
        %2418 = vperm.xlu0 %2417, %v2384
        %v2419 = vpop.permute.xlu0 %2418
        %2422 = vset.pattern.permute.xlu0 0
        %2423 = vperm.xlu0 %2422, %v2385
        %v2424 = vpop.permute.xlu0 %2423
        %2427 = vset.pattern.permute.xlu0 0
        %2428 = vperm.xlu0 %2427, %v2386
        %v2429 = vpop.permute.xlu0 %2428
        %2432 = vset.pattern.permute.xlu0 0
        %2433 = vperm.xlu0 %2432, %v2387
        %v2434 = vpop.permute.xlu0 %2433
        %2437 = vset.pattern.permute.xlu0 0
        %2438 = vperm.xlu0 %2437, %v2388
        %v2439 = vpop.permute.xlu0 %2438
        %2442 = vset.pattern.permute.xlu0 0
        %2443 = vperm.xlu0 %2442, %v2389
        %v2444 = vpop.permute.xlu0 %2443
        %2447 = vset.pattern.permute.xlu0 0
        %2448 = vperm.xlu0 %2447, %v2390
        %v2449 = vpop.permute.xlu0 %2448
        %2452 = vset.pattern.permute.xlu0 0
        %2453 = vperm.xlu0 %2452, %v2391
        %v2454 = vpop.permute.xlu0 %2453
        %2457 = vset.pattern.permute.xlu0 0
        %2458 = vperm.xlu0 %2457, %v2392
        %v2459 = vpop.permute.xlu0 %2458
        %2462 = vset.pattern.permute.xlu0 0
        %2463 = vperm.xlu0 %2462, %v2393
        %v2464 = vpop.permute.xlu0 %2463
        %2467 = vset.pattern.permute.xlu0 0
        %2468 = vperm.xlu0 %2467, %v2394
        %v2469 = vpop.permute.xlu0 %2468
        %2472 = vset.pattern.permute.xlu0 0
        %2473 = vperm.xlu0 %2472, %v2395
        %v2474 = vpop.permute.xlu0 %2473
        %2477 = vset.pattern.permute.xlu0 0
        %2478 = vperm.xlu0 %2477, %v2396
        %v2479 = vpop.permute.xlu0 %2478
        %2482 = vset.pattern.permute.xlu0 0
        %2483 = vperm.xlu0 %2482, %v2397
        %v2484 = vpop.permute.xlu0 %2483
        %2487 = vset.pattern.permute.xlu0 0
        %2488 = vperm.xlu0 %2487, %v2398
        %v2489 = vpop.permute.xlu0 %2488
        %2492 = vset.pattern.permute.xlu0 0
        %2493 = vperm.xlu0 %2492, %v2399
        %v2494 = vpop.permute.xlu0 %2493
        %2497 = vset.pattern.permute.xlu0 0
        %2498 = vperm.xlu0 %2497, %v2400
        %v2499 = vpop.permute.xlu0 %2498
        %2502 = vset.pattern.permute.xlu0 0
        %2503 = vperm.xlu0 %2502, %v2401
        %v2504 = vpop.permute.xlu0 %2503
        %2507 = vset.pattern.permute.xlu0 0
        %2508 = vperm.xlu0 %2507, %v2402
        %v2509 = vpop.permute.xlu0 %2508
        %2512 = vset.pattern.permute.xlu0 0
        %2513 = vperm.xlu0 %2512, %v2403
        %v2514 = vpop.permute.xlu0 %2513
        %2517 = vset.pattern.permute.xlu0 0
        %2518 = vperm.xlu0 %2517, %v2404
        %v2519 = vpop.permute.xlu0 %2518
        %2522 = vset.pattern.permute.xlu0 0
        %2523 = vperm.xlu0 %2522, %v2405
        %v2524 = vpop.permute.xlu0 %2523
        %2527 = vset.pattern.permute.xlu0 0
        %2528 = vperm.xlu0 %2527, %v2406
        %v2529 = vpop.permute.xlu0 %2528
        %2532 = vset.pattern.permute.xlu0 0
        %2533 = vperm.xlu0 %2532, %v2407
        %v2534 = vpop.permute.xlu0 %2533
        %2537 = vset.pattern.permute.xlu0 0
        %2538 = vperm.xlu0 %2537, %v2408
        %v2539 = vpop.permute.xlu0 %2538
        %2542 = vset.pattern.permute.xlu0 0
        %2543 = vperm.xlu0 %2542, %v2409
        %v2544 = vpop.permute.xlu0 %2543
        %2547 = vset.pattern.permute.xlu0 0
        %2548 = vperm.xlu0 %2547, %v2410
        %v2549 = vpop.permute.xlu0 %2548
        %v2551 = vmul.f32 %v2215, %v2414
        %v2552 = vmul.f32 %v2216, %v2419
        %v2553 = vmul.f32 %v2217, %v2424
        %v2554 = vmul.f32 %v2218, %v2429
        %v2555 = vmul.f32 %v2219, %v2434
        %v2556 = vmul.f32 %v2220, %v2439
        %v2557 = vmul.f32 %v2221, %v2444
        %v2558 = vmul.f32 %v2222, %v2449
        %v2559 = vmul.f32 %v2223, %v2454
        %v2560 = vmul.f32 %v2224, %v2459
        %v2561 = vmul.f32 %v2225, %v2464
        %v2562 = vmul.f32 %v2226, %v2469
        %v2563 = vmul.f32 %v2227, %v2474
        %v2564 = vmul.f32 %v2228, %v2479
        %v2565 = vmul.f32 %v2229, %v2484
        %v2566 = vmul.f32 %v2230, %v2489
        %v2567 = vmul.f32 %v2231, %v2494
        %v2568 = vmul.f32 %v2232, %v2499
        %v2569 = vmul.f32 %v2233, %v2504
        %v2570 = vmul.f32 %v2234, %v2509
        %v2571 = vmul.f32 %v2235, %v2514
        %v2572 = vmul.f32 %v2236, %v2519
        %v2573 = vmul.f32 %v2237, %v2524
        %v2574 = vmul.f32 %v2238, %v2529
        %v2575 = vmul.f32 %v2239, %v2534
        %v2576 = vmul.f32 %v2240, %v2539
        %v2577 = vmul.f32 %v2241, %v2544
        %v2578 = vmul.f32 %v2242, %v2549
        %v2579 = vadd.f32 %v2551, %v2552
        %v2580 = vadd.f32 %v2579, %v2553
        %v2581 = vadd.f32 %v2580, %v2554
        %v2582 = vadd.f32 %v2581, %v2555
        %v2583 = vadd.f32 %v2582, %v2556
        %v2584 = vadd.f32 %v2583, %v2557
        %v2585 = vadd.f32 %v2584, %v2558
        %v2586 = vadd.f32 %v2585, %v2559
        %v2587 = vadd.f32 %v2586, %v2560
        %v2588 = vadd.f32 %v2587, %v2561
        %v2589 = vadd.f32 %v2588, %v2562
        %v2590 = vadd.f32 %v2589, %v2563
        %v2591 = vadd.f32 %v2590, %v2564
        %v2592 = vadd.f32 %v2591, %v2565
        %v2593 = vadd.f32 %v2592, %v2566
        %v2594 = vadd.f32 %v2593, %v2567
        %v2595 = vadd.f32 %v2594, %v2568
        %v2596 = vadd.f32 %v2595, %v2569
        %v2597 = vadd.f32 %v2596, %v2570
        %v2598 = vadd.f32 %v2597, %v2571
        %v2599 = vadd.f32 %v2598, %v2572
        %v2600 = vadd.f32 %v2599, %v2573
        %v2601 = vadd.f32 %v2600, %v2574
        %v2602 = vadd.f32 %v2601, %v2575
        %v2603 = vadd.f32 %v2602, %v2576
        %v2604 = vadd.f32 %v2603, %v2577
        %v2605 = vadd.f32 %v2604, %v2578
        %v2606 = vrot.slane %v2605, 4
        %v2607 = vadd.f32 %v2605, %v2606
        %v2608 = vrot.slane %v2607, 2
        %v2609 = vadd.f32 %v2607, %v2608
        %v2610 = vrot.slane %v2609, 1
        %v2611 = vadd.f32 %v2609, %v2610
        %v2612 = vmul.f32 %v2611, 0.0051020407
        %v2613 = vsub.f32 %v2215, %v2612
        %v2614 = vsub.f32 %v2216, %v2612
        %v2615 = vsub.f32 %v2217, %v2612
        %v2616 = vsub.f32 %v2218, %v2612
        %v2617 = vsub.f32 %v2219, %v2612
        %v2618 = vsub.f32 %v2220, %v2612
        %v2619 = vsub.f32 %v2221, %v2612
        %v2620 = vsub.f32 %v2222, %v2612
        %v2621 = vsub.f32 %v2223, %v2612
        %v2622 = vsub.f32 %v2224, %v2612
        %v2623 = vsub.f32 %v2225, %v2612
        %v2624 = vsub.f32 %v2226, %v2612
        %v2625 = vsub.f32 %v2227, %v2612
        %v2626 = vsub.f32 %v2228, %v2612
        %v2627 = vsub.f32 %v2229, %v2612
        %v2628 = vsub.f32 %v2230, %v2612
        %v2629 = vsub.f32 %v2231, %v2612
        %v2630 = vsub.f32 %v2232, %v2612
        %v2631 = vsub.f32 %v2233, %v2612
        %v2632 = vsub.f32 %v2234, %v2612
        %v2633 = vsub.f32 %v2235, %v2612
        %v2634 = vsub.f32 %v2236, %v2612
        %v2635 = vsub.f32 %v2237, %v2612
        %v2636 = vsub.f32 %v2238, %v2612
        %v2637 = vsub.f32 %v2239, %v2612
        %v2638 = vsub.f32 %v2240, %v2612
        %v2639 = vsub.f32 %v2241, %v2612
        %v2640 = vsub.f32 %v2242, %v2612
        %v2641 = vmul.f32 %v2613, %v2414
        %v2642 = vmul.f32 %v2614, %v2419
        %v2643 = vmul.f32 %v2615, %v2424
        %v2644 = vmul.f32 %v2616, %v2429
        %v2645 = vmul.f32 %v2617, %v2434
        %v2646 = vmul.f32 %v2618, %v2439
        %v2647 = vmul.f32 %v2619, %v2444
        %v2648 = vmul.f32 %v2620, %v2449
        %v2649 = vmul.f32 %v2621, %v2454
        %v2650 = vmul.f32 %v2622, %v2459
        %v2651 = vmul.f32 %v2623, %v2464
        %v2652 = vmul.f32 %v2624, %v2469
        %v2653 = vmul.f32 %v2625, %v2474
        %v2654 = vmul.f32 %v2626, %v2479
        %v2655 = vmul.f32 %v2627, %v2484
        %v2656 = vmul.f32 %v2628, %v2489
        %v2657 = vmul.f32 %v2629, %v2494
        %v2658 = vmul.f32 %v2630, %v2499
        %v2659 = vmul.f32 %v2631, %v2504
        %v2660 = vmul.f32 %v2632, %v2509
        %v2661 = vmul.f32 %v2633, %v2514
        %v2662 = vmul.f32 %v2634, %v2519
        %v2663 = vmul.f32 %v2635, %v2524
        %v2664 = vmul.f32 %v2636, %v2529
        %v2665 = vmul.f32 %v2637, %v2534
        %v2666 = vmul.f32 %v2638, %v2539
        %v2667 = vmul.f32 %v2639, %v2544
        %v2668 = vmul.f32 %v2640, %v2549
        %v2669 = vmul.f32 %v2641, %v2641
        %v2670 = vmul.f32 %v2642, %v2642
        %v2671 = vmul.f32 %v2643, %v2643
        %v2672 = vmul.f32 %v2644, %v2644
        %v2673 = vmul.f32 %v2645, %v2645
        %v2674 = vmul.f32 %v2646, %v2646
        %v2675 = vmul.f32 %v2647, %v2647
        %v2676 = vmul.f32 %v2648, %v2648
        %v2677 = vmul.f32 %v2649, %v2649
        %v2678 = vmul.f32 %v2650, %v2650
        %v2679 = vmul.f32 %v2651, %v2651
        %v2680 = vmul.f32 %v2652, %v2652
        %v2681 = vmul.f32 %v2653, %v2653
        %v2682 = vmul.f32 %v2654, %v2654
        %v2683 = vmul.f32 %v2655, %v2655
        %v2684 = vmul.f32 %v2656, %v2656
        %v2685 = vmul.f32 %v2657, %v2657
        %v2686 = vmul.f32 %v2658, %v2658
        %v2687 = vmul.f32 %v2659, %v2659
        %v2688 = vmul.f32 %v2660, %v2660
        %v2689 = vmul.f32 %v2661, %v2661
        %v2690 = vmul.f32 %v2662, %v2662
        %v2691 = vmul.f32 %v2663, %v2663
        %v2692 = vmul.f32 %v2664, %v2664
        %v2693 = vmul.f32 %v2665, %v2665
        %v2694 = vmul.f32 %v2666, %v2666
        %v2695 = vmul.f32 %v2667, %v2667
        %v2696 = vmul.f32 %v2668, %v2668
        %v2697 = vadd.f32 %v2669, %v2670
        %v2698 = vadd.f32 %v2697, %v2671
        %v2699 = vadd.f32 %v2698, %v2672
        %v2700 = vadd.f32 %v2699, %v2673
        %v2701 = vadd.f32 %v2700, %v2674
        %v2702 = vadd.f32 %v2701, %v2675
        %v2703 = vadd.f32 %v2702, %v2676
        %v2704 = vadd.f32 %v2703, %v2677
        %v2705 = vadd.f32 %v2704, %v2678
        %v2706 = vadd.f32 %v2705, %v2679
        %v2707 = vadd.f32 %v2706, %v2680
        %v2708 = vadd.f32 %v2707, %v2681
        %v2709 = vadd.f32 %v2708, %v2682
        %v2710 = vadd.f32 %v2709, %v2683
        %v2711 = vadd.f32 %v2710, %v2684
        %v2712 = vadd.f32 %v2711, %v2685
        %v2713 = vadd.f32 %v2712, %v2686
        %v2714 = vadd.f32 %v2713, %v2687
        %v2715 = vadd.f32 %v2714, %v2688
        %v2716 = vadd.f32 %v2715, %v2689
        %v2717 = vadd.f32 %v2716, %v2690
        %v2718 = vadd.f32 %v2717, %v2691
        %v2719 = vadd.f32 %v2718, %v2692
        %v2720 = vadd.f32 %v2719, %v2693
        %v2721 = vadd.f32 %v2720, %v2694
        %v2722 = vadd.f32 %v2721, %v2695
        %v2723 = vadd.f32 %v2722, %v2696
        %v2724 = vrot.slane %v2723, 4
        %v2725 = vadd.f32 %v2723, %v2724
        %v2726 = vrot.slane %v2725, 2
        %v2727 = vadd.f32 %v2725, %v2726
        %v2728 = vrot.slane %v2727, 1
        %v2729 = vadd.f32 %v2727, %v2728
        %vm2730 = vcmask 1040384
        %v2731 = vsel %vm2730, %v2611, %v2729
        %2732 = vst [vmem:[%s255] sm:$0x3] %v2731
        %s2733 = sand.u32 %s102, 1
        %s2734 = scalar_lea.sflag [#allocation4], %s2733
        %s2735 = sand.u32 %s102, 1
        %s2736 = smul.addr %s2735, 112
        %s2737 = scalar_lea.vmem [#allocation8], %s2736
        %s2738 = sand.u32 %s128, 1
        %s2739 = scalar_lea.sflag [#allocation10], %s2738
        %s2740 = sand.u32 %s128, 1
        %s2741 = smul.addr %s2740, 2
        %s2742 = scalar_lea.vmem [#allocation9], %s2741
        // Predicated region
        $region45: #{tpu_custom_call.1} parent=31 // pred_check
          %p2743 = pneg %p112
        $region46: #{tpu_custom_call.1} parent=31 // pred_check_branch
          %2745 = sbr.rel (%p2743) target = $region48
        $region47: #{tpu_custom_call.1} parent=31 // pred_region
          %s2747 = ssub.s32 1792, 1792
          %2748 = vsyncadd %s2734, %s2747
          %s2749 = smul.addr %s26, 28
          %s2750 = smul.addr %s2749, 64
          %s2751 = scalar_lea.hbm %s3, %s2750
          %s2752 = sshll.u32 %s2737, 4
          %s2753 = int_to_ptr.vmem [resolvable:$true] %s2752
          %2758 = dma.vmem_to_hbm [thread:$0]  %s2753, 1792, %s2751, %s2734, 64, 64, 4
        $region48: #{tpu_custom_call.1} parent=31 // pred_fallthru
          _
        // Predicated region
        $region49: #{tpu_custom_call.1} parent=31 // pred_check
          %p2759 = pneg %p138
        $region50: #{tpu_custom_call.1} parent=31 // pred_check_branch
          %2761 = sbr.rel (%p2759) target = $region52
        $region51: #{tpu_custom_call.1} parent=31 // pred_region
          %s2763 = ssub.s32 32, 32
          %2764 = vsyncadd %s2739, %s2763
          %s2765 = smul.addr %s26, 32
          %s2766 = scalar_lea.hbm %s4, %s2765
          %s2768 = sshll.u32 %s2742, 4
          %s2769 = int_to_ptr.vmem [resolvable:$true] %s2768
          %2771 = dma.vmem_to_hbm [thread:$0]  %s2769, 32, %s2766, %s2739
        $region52: #{tpu_custom_call.1} parent=31 // pred_fallthru
          _
      $region32: #{tpu_custom_call.1} parent=5 // pred_fallthru
        _
      %p2772 = scmp.le.s32.totalorder 2, %s21
      // Predicated region
      $region53: #{tpu_custom_call.1} parent=5 // pred_check
        %p2773 = pneg %p2772
      $region54: #{tpu_custom_call.1} parent=5 // pred_check_branch
        %2775 = sbr.rel (%p2773) target = $region56
      $region55: #{tpu_custom_call.1} parent=5 // pred_region
        %s2776 = ssub.s32 %s21, 2
        // Predicated region
        $region57: #{tpu_custom_call.1} parent=55 // pred_check
          %p2777 = pneg %p118
        $region58: #{tpu_custom_call.1} parent=55 // pred_check_branch
          %2779 = sbr.rel (%p2777) target = $region60
        $region59: #{tpu_custom_call.1} parent=55 // pred_region
          %s2780 = sand.u32 %s103, 1
          %s2781 = scalar_lea.sflag [#allocation4], %s2780
          %s2782 = sand.u32 %s103, 1
          %s2783 = smul.addr %s2782, 112
          %s2784 = scalar_lea.vmem [#allocation8], %s2783
          %2785 = dma.done %s2781, 1792
        $region60: #{tpu_custom_call.1} parent=55 // pred_fallthru
          _
        // Predicated region
        $region61: #{tpu_custom_call.1} parent=55 // pred_check
          %p2786 = pneg %p144
        $region62: #{tpu_custom_call.1} parent=55 // pred_check_branch
          %2788 = sbr.rel (%p2786) target = $region64
        $region63: #{tpu_custom_call.1} parent=55 // pred_region
          %s2789 = sand.u32 %s129, 1
          %s2790 = scalar_lea.sflag [#allocation10], %s2789
          %s2791 = sand.u32 %s129, 1
          %s2792 = smul.addr %s2791, 2
          %s2793 = scalar_lea.vmem [#allocation9], %s2792
          %2794 = dma.done %s2790, 32
        $region64: #{tpu_custom_call.1} parent=55 // pred_fallthru
          _
      $region56: #{tpu_custom_call.1} parent=5 // pred_fallthru
        _
    $region6: #{tpu_custom_call.1} parent=1 // loop_footer
      %s25 = sadd.s32 1, %s21
    $region7: #{tpu_custom_call.1} parent=1 // loop_footer_branch
      %20 = sbr.rel target = $region3
    $region8: #{tpu_custom_call.1} parent=1 // loop_exit
      _
    %2795 = vsyncpa [#allocation3], 1
    %s2796 = scalar_lea.sflag [#allocation3], 1
    %2797 = vsyncpa %s2796, 1
    %2798 = vsyncpa [#allocation6], 1
    %2799 = vsyncpa [#allocation4], 1
    %s2800 = scalar_lea.sflag [#allocation4], 1
    %2801 = vsyncpa %s2800, 1
    %2802 = vsyncpa [#allocation10], 1
    %s2803 = scalar_lea.sflag [#allocation10], 1
    %2804 = vsyncpa %s2803, 1

</llo_original>
